<compile_context>
chip_gen: v7x
topology: tpu7x:2x2x1
jax: 0.10.0
libtpu: 0.0.40
codegen_flags: <defaults>
</compile_context>

<pallas_src>
import functools

import jax
import jax.numpy as jnp
from jax.experimental import pallas as pl
from jax.experimental.pallas import tpu as pltpu


def _odeblock_kernel(x_ref, code_ref, w_ref, o_ref, *, num_steps, H, W, K, pad):
    """Runs `num_steps` fused Euler steps on one lane block (whole images).

    x_ref    : (C, Lblk)           channel-major activation slab
                                   (batch folded into the lane axis)
    code_ref : (1, Lblk) int32     bit t == 1 iff conv tap t is in-bounds
    w_ref    : (C, K*K*C + 1)      dt-scaled tap-major weights, dt-scaled bias
                                   folded in as the last column
    o_ref    : (C, Lblk)           output slab after num_steps steps
    """
    c_out, l_blk = o_ref.shape
    c_in = x_ref.shape[0]
    n_taps = K * K

    # Loop invariants: slice the per-tap weight blocks and the bias column
    # once, decode the 9 boundary masks once (none of this depends on step).
    w = w_ref[...]
    w_taps = [w[:, t * c_in:(t + 1) * c_in] for t in range(n_taps)]
    bias_full = jnp.broadcast_to(w[:, n_taps * c_in:], (c_out, l_blk))

    code = code_ref[...]
    masks = [((code >> t) & 1) != 0 for t in range(n_taps)]

    x0 = x_ref[...].astype(jnp.float32)

    def step(_, x):
        acc = bias_full                         # start from the dt-scaled bias
        for kh in range(K):
            for kw in range(K):
                t = kh * K + kw
                s = (kh - pad) * W + (kw - pad)  # tap[i] = x[i + s] (in bounds)
                if s == 0:
                    tap = x                      # centre tap: always in bounds
                else:
                    shifted = pltpu.roll(x, (-s) % l_blk, axis=1)  # XLU slot
                    tap = jnp.where(masks[t], shifted, 0.0)        # VPU select
                acc = acc + jnp.dot(w_taps[t], tap,
                                    preferred_element_type=jnp.float32)
        return x + acc                           # x + dt*(conv(x) + bias)

    x_final = jax.lax.fori_loop(0, num_steps, step, x0)
    o_ref[...] = x_final.astype(o_ref.dtype)


def _choose_num_blocks(N, H, W):
    """Image-aligned lane blocks: 1 block at toy sizes (single-TC v5e/v6e has
    nothing to gain from a sequential grid), even splits with >=1024-lane
    blocks when the slab is large enough for v7x's two TensorCores."""
    img = H * W
    L = N * img
    if L <= 2048:
        return 1
    g_best = 1
    for g in range(2, N + 1, 2):                 # even -> both v7x TCs get work
        if N % g:
            continue
        l_blk = (N // g) * img
        if l_blk % 128 == 0 and l_blk >= 1024:
            g_best = g
    return g_best


def odeblock_integrate(x, weight, bias, dt, num_steps):
    """num_steps fused Euler steps of x <- x + dt*(conv3x3(x) + bias).

    x: (N, C, H, W) f32, weight: (C, C, K, K), bias: (C,), dt python float.
    """
    N, C, H, W = x.shape
    K = weight.shape[-1]
    pad = (K - 1) // 2
    L = N * H * W

    # ---- wrapper-side layout plumbing, paid once per whole integration ----
    # channel-major slab: batch folded into the 128-wide lane axis
    x2d = jnp.transpose(x, (1, 0, 2, 3)).reshape(C, L)
    # tap-major, channel-last weights with dt folded in; dt*bias last column
    w2 = jnp.transpose(weight, (0, 2, 3, 1)).reshape(C, K * K * C)
    w_aug = jnp.concatenate([w2 * dt, (bias * dt).reshape(C, 1)], axis=1)
    # per-lane 9-bit "tap valid" code (depends only on (h, w) inside an image)
    r = jnp.arange(H, dtype=jnp.int32)[:, None]
    c = jnp.arange(W, dtype=jnp.int32)[None, :]
    code_img = jnp.zeros((H, W), dtype=jnp.int32)
    for kh in range(K):
        for kw in range(K):
            dr, dc = kh - pad, kw - pad
            ok = (r + dr >= 0) & (r + dr < H) & (c + dc >= 0) & (c + dc < W)
            code_img = code_img | (ok.astype(jnp.int32) << (kh * K + kw))
    code = jnp.tile(code_img.reshape(1, H * W), (1, N))          # (1, L) int32

    G = _choose_num_blocks(N, H, W)
    l_blk = L // G
    # pltpu.roll wrap-around is only masked correctly if every block holds
    # whole images (the wrapped lanes are exactly the masked boundary lanes).
    assert l_blk % (H * W) == 0, "lane blocks must be image-aligned"

    kernel = functools.partial(_odeblock_kernel,
                               num_steps=num_steps, H=H, W=W, K=K, pad=pad)

    out2d = pl.pallas_call(
        kernel,
        out_shape=jax.ShapeDtypeStruct((C, L), x.dtype),
        grid=(G,),
        in_specs=[
            pl.BlockSpec((C, l_blk), lambda g: (0, g)),
            pl.BlockSpec((1, l_blk), lambda g: (0, g)),
            pl.BlockSpec((C, K * K * C + 1), lambda g: (0, 0)),
        ],
        out_specs=pl.BlockSpec((C, l_blk), lambda g: (0, g)),
        compiler_params=pltpu.CompilerParams(
            dimension_semantics=("parallel",)),
    )(x2d, code, w_aug)

    # back to NCHW (paid once for the whole integration, not per step)
    return jnp.transpose(out2d.reshape(C, N, H, W), (1, 0, 2, 3))


def odeblock_forward(x, weight, bias, dt):
    """The module's forward: x + dt * layer(x)  (a single Euler step)."""
    return odeblock_integrate(x, weight, bias, dt, num_steps=1)


def odeblock_reference(x, weight, bias, dt):
    y = jax.lax.conv_general_dilated(
        x, weight, window_strides=(1, 1), padding="SAME",
        dimension_numbers=("NCHW", "OIHW", "NCHW"))
    return x + dt * (y + bias[None, :, None, None])


if __name__ == "__main__":
    # Small shapes consistent with the module's (images, channels, H, W) input.
    N, C, H, W = 2, 4, 16, 16
    num_steps = 10
    Tf = 2.0
    dt = Tf / num_steps

    key = jax.random.PRNGKey(0)
    kx, kw, kb = jax.random.split(key, 3)
    x = jax.random.normal(kx, (N, C, H, W), dtype=jnp.float32)
    # Deterministic Conv2d(C, C, 3, padding=1) parameters (synthetic init).
    weight = jax.random.normal(kw, (C, C, 3, 3), dtype=jnp.float32) * 0.1
    bias = jax.random.normal(kb, (C,), dtype=jnp.float32) * 0.1

    # Single ODE step == the module's forward pass.
    out1 = jax.block_until_ready(odeblock_forward(x, weight, bias, dt))
    ref1 = odeblock_reference(x, weight, bias, dt)
    assert out1.shape == (N, C, H, W)
    assert jnp.allclose(out1, ref1, atol=1e-4, rtol=1e-4)

    # Fused num_steps integration: one pallas_call for the whole loop.
    outN = jax.block_until_ready(
        odeblock_integrate(x, weight, bias, dt, num_steps))
    refN = x
    for _ in range(num_steps):
        refN = odeblock_reference(refN, weight, bias, dt)
    assert jnp.allclose(outN, refN, atol=1e-3, rtol=1e-3)

    print("KERNEL_OK")
</pallas_src>

<mosaic_0001>
module attributes {stable_mosaic.version = 11 : i64} {
  func.func @_odeblock_kernel(%arg0: i32, %arg1: memref<4x512xf32, #tpu.memory_space<vmem>>, %arg2: memref<1x512xi32, #tpu.memory_space<vmem>>, %arg3: memref<4x37xf32, #tpu.memory_space<vmem>>, %arg4: memref<4x512xf32, #tpu.memory_space<vmem>>) attributes {dimension_semantics = [#tpu.dimension_semantics<parallel>], iteration_bounds = array<i64: 1>, scalar_prefetch = 0 : i64, scratch_operands = 0 : i64, tpu.core_type = #tpu.core_type<tc>, window_params = [{transform_indices = @transform_0, window_bounds = array<i64: 4, 512>}, {transform_indices = @transform_1, window_bounds = array<i64: 1, 512>}, {pipeline_mode = #tpu.pipeline_mode<synchronous>, transform_indices = @transform_2, window_bounds = array<i64: 4, 37>}, {transform_indices = @transform_3, window_bounds = array<i64: 4, 512>}]} {
    %c0 = arith.constant 0 : index
    %c0_0 = arith.constant 0 : index
    %0 = vector.load %arg3[%c0, %c0_0] : memref<4x37xf32, #tpu.memory_space<vmem>>, vector<4x37xf32>
    %1 = vector.extract_strided_slice %0 {offsets = [0, 0], sizes = [4, 4], strides = [1, 1]} : vector<4x37xf32> to vector<4x4xf32>
    %2 = vector.extract_strided_slice %0 {offsets = [0, 4], sizes = [4, 4], strides = [1, 1]} : vector<4x37xf32> to vector<4x4xf32>
    %3 = vector.extract_strided_slice %0 {offsets = [0, 8], sizes = [4, 4], strides = [1, 1]} : vector<4x37xf32> to vector<4x4xf32>
    %4 = vector.extract_strided_slice %0 {offsets = [0, 12], sizes = [4, 4], strides = [1, 1]} : vector<4x37xf32> to vector<4x4xf32>
    %5 = vector.extract_strided_slice %0 {offsets = [0, 16], sizes = [4, 4], strides = [1, 1]} : vector<4x37xf32> to vector<4x4xf32>
    %6 = vector.extract_strided_slice %0 {offsets = [0, 20], sizes = [4, 4], strides = [1, 1]} : vector<4x37xf32> to vector<4x4xf32>
    %7 = vector.extract_strided_slice %0 {offsets = [0, 24], sizes = [4, 4], strides = [1, 1]} : vector<4x37xf32> to vector<4x4xf32>
    %8 = vector.extract_strided_slice %0 {offsets = [0, 28], sizes = [4, 4], strides = [1, 1]} : vector<4x37xf32> to vector<4x4xf32>
    %9 = vector.extract_strided_slice %0 {offsets = [0, 32], sizes = [4, 4], strides = [1, 1]} : vector<4x37xf32> to vector<4x4xf32>
    %10 = vector.extract_strided_slice %0 {offsets = [0, 36], sizes = [4, 1], strides = [1, 1]} : vector<4x37xf32> to vector<4x1xf32>
    %11 = vector.shape_cast %10 : vector<4x1xf32> to vector<4x1xf32>
    %12 = vector.broadcast %11 : vector<4x1xf32> to vector<4x512xf32>
    %c0_1 = arith.constant 0 : index
    %c0_2 = arith.constant 0 : index
    %13 = vector.load %arg2[%c0_1, %c0_2] : memref<1x512xi32, #tpu.memory_space<vmem>>, vector<1x512xi32>
    %c0_i32 = arith.constant 0 : i32
    %14 = vector.broadcast %c0_i32 : i32 to vector<1x512xi32>
    %15 = arith.shrsi %13, %14 : vector<1x512xi32>
    %c1_i32 = arith.constant 1 : i32
    %16 = vector.broadcast %c1_i32 : i32 to vector<1x512xi32>
    %17 = arith.andi %15, %16 : vector<1x512xi32>
    %c0_i32_3 = arith.constant 0 : i32
    %18 = vector.broadcast %c0_i32_3 : i32 to vector<1x512xi32>
    %19 = arith.cmpi ne, %17, %18 : vector<1x512xi32>
    %c1_i32_4 = arith.constant 1 : i32
    %20 = vector.broadcast %c1_i32_4 : i32 to vector<1x512xi32>
    %21 = arith.shrsi %13, %20 : vector<1x512xi32>
    %c1_i32_5 = arith.constant 1 : i32
    %22 = vector.broadcast %c1_i32_5 : i32 to vector<1x512xi32>
    %23 = arith.andi %21, %22 : vector<1x512xi32>
    %c0_i32_6 = arith.constant 0 : i32
    %24 = vector.broadcast %c0_i32_6 : i32 to vector<1x512xi32>
    %25 = arith.cmpi ne, %23, %24 : vector<1x512xi32>
    %c2_i32 = arith.constant 2 : i32
    %26 = vector.broadcast %c2_i32 : i32 to vector<1x512xi32>
    %27 = arith.shrsi %13, %26 : vector<1x512xi32>
    %c1_i32_7 = arith.constant 1 : i32
    %28 = vector.broadcast %c1_i32_7 : i32 to vector<1x512xi32>
    %29 = arith.andi %27, %28 : vector<1x512xi32>
    %c0_i32_8 = arith.constant 0 : i32
    %30 = vector.broadcast %c0_i32_8 : i32 to vector<1x512xi32>
    %31 = arith.cmpi ne, %29, %30 : vector<1x512xi32>
    %c3_i32 = arith.constant 3 : i32
    %32 = vector.broadcast %c3_i32 : i32 to vector<1x512xi32>
    %33 = arith.shrsi %13, %32 : vector<1x512xi32>
    %c1_i32_9 = arith.constant 1 : i32
    %34 = vector.broadcast %c1_i32_9 : i32 to vector<1x512xi32>
    %35 = arith.andi %33, %34 : vector<1x512xi32>
    %c0_i32_10 = arith.constant 0 : i32
    %36 = vector.broadcast %c0_i32_10 : i32 to vector<1x512xi32>
    %37 = arith.cmpi ne, %35, %36 : vector<1x512xi32>
    %c5_i32 = arith.constant 5 : i32
    %38 = vector.broadcast %c5_i32 : i32 to vector<1x512xi32>
    %39 = arith.shrsi %13, %38 : vector<1x512xi32>
    %c1_i32_11 = arith.constant 1 : i32
    %40 = vector.broadcast %c1_i32_11 : i32 to vector<1x512xi32>
    %41 = arith.andi %39, %40 : vector<1x512xi32>
    %c0_i32_12 = arith.constant 0 : i32
    %42 = vector.broadcast %c0_i32_12 : i32 to vector<1x512xi32>
    %43 = arith.cmpi ne, %41, %42 : vector<1x512xi32>
    %c6_i32 = arith.constant 6 : i32
    %44 = vector.broadcast %c6_i32 : i32 to vector<1x512xi32>
    %45 = arith.shrsi %13, %44 : vector<1x512xi32>
    %c1_i32_13 = arith.constant 1 : i32
    %46 = vector.broadcast %c1_i32_13 : i32 to vector<1x512xi32>
    %47 = arith.andi %45, %46 : vector<1x512xi32>
    %c0_i32_14 = arith.constant 0 : i32
    %48 = vector.broadcast %c0_i32_14 : i32 to vector<1x512xi32>
    %49 = arith.cmpi ne, %47, %48 : vector<1x512xi32>
    %c7_i32 = arith.constant 7 : i32
    %50 = vector.broadcast %c7_i32 : i32 to vector<1x512xi32>
    %51 = arith.shrsi %13, %50 : vector<1x512xi32>
    %c1_i32_15 = arith.constant 1 : i32
    %52 = vector.broadcast %c1_i32_15 : i32 to vector<1x512xi32>
    %53 = arith.andi %51, %52 : vector<1x512xi32>
    %c0_i32_16 = arith.constant 0 : i32
    %54 = vector.broadcast %c0_i32_16 : i32 to vector<1x512xi32>
    %55 = arith.cmpi ne, %53, %54 : vector<1x512xi32>
    %c8_i32 = arith.constant 8 : i32
    %56 = vector.broadcast %c8_i32 : i32 to vector<1x512xi32>
    %57 = arith.shrsi %13, %56 : vector<1x512xi32>
    %c1_i32_17 = arith.constant 1 : i32
    %58 = vector.broadcast %c1_i32_17 : i32 to vector<1x512xi32>
    %59 = arith.andi %57, %58 : vector<1x512xi32>
    %c0_i32_18 = arith.constant 0 : i32
    %60 = vector.broadcast %c0_i32_18 : i32 to vector<1x512xi32>
    %61 = arith.cmpi ne, %59, %60 : vector<1x512xi32>
    %c0_19 = arith.constant 0 : index
    %c0_20 = arith.constant 0 : index
    %62 = vector.load %arg1[%c0_19, %c0_20] : memref<4x512xf32, #tpu.memory_space<vmem>>, vector<4x512xf32>
    %c0_i32_21 = arith.constant 0 : i32
    %c17_i32 = arith.constant 17 : i32
    %63 = tpu.dynamic_rotate %62 by %c17_i32 dim 1 : vector<4x512xf32>, i32 -> vector<4x512xf32>
    %cst = arith.constant 0.000000e+00 : f32
    %64 = vector.shape_cast %19 : vector<1x512xi1> to vector<1x512xi1>
    %65 = vector.broadcast %64 : vector<1x512xi1> to vector<4x512xi1>
    %66 = vector.broadcast %cst : f32 to vector<4x512xf32>
    %67 = arith.select %65, %63, %66 : vector<4x512xi1>, vector<4x512xf32>
    %cst_22 = arith.constant dense<0.000000e+00> : vector<4x512xf32>
    %68 = tpu.matmul %1, %67, %cst_22 {dimension_numbers = #tpu.dot_dimension_numbers<[1], [0], [0], [1], [0, 0, 1, 1], [], []>} : vector<4x4xf32>, vector<4x512xf32>, vector<4x512xf32> -> vector<4x512xf32>
    %69 = arith.addf %12, %68 : vector<4x512xf32>
    %c16_i32 = arith.constant 16 : i32
    %70 = tpu.dynamic_rotate %62 by %c16_i32 dim 1 : vector<4x512xf32>, i32 -> vector<4x512xf32>
    %cst_23 = arith.constant 0.000000e+00 : f32
    %71 = vector.shape_cast %25 : vector<1x512xi1> to vector<1x512xi1>
    %72 = vector.broadcast %71 : vector<1x512xi1> to vector<4x512xi1>
    %73 = vector.broadcast %cst_23 : f32 to vector<4x512xf32>
    %74 = arith.select %72, %70, %73 : vector<4x512xi1>, vector<4x512xf32>
    %cst_24 = arith.constant dense<0.000000e+00> : vector<4x512xf32>
    %75 = tpu.matmul %2, %74, %cst_24 {dimension_numbers = #tpu.dot_dimension_numbers<[1], [0], [0], [1], [0, 0, 1, 1], [], []>} : vector<4x4xf32>, vector<4x512xf32>, vector<4x512xf32> -> vector<4x512xf32>
    %76 = arith.addf %69, %75 : vector<4x512xf32>
    %c15_i32 = arith.constant 15 : i32
    %77 = tpu.dynamic_rotate %62 by %c15_i32 dim 1 : vector<4x512xf32>, i32 -> vector<4x512xf32>
    %cst_25 = arith.constant 0.000000e+00 : f32
    %78 = vector.shape_cast %31 : vector<1x512xi1> to vector<1x512xi1>
    %79 = vector.broadcast %78 : vector<1x512xi1> to vector<4x512xi1>
    %80 = vector.broadcast %cst_25 : f32 to vector<4x512xf32>
    %81 = arith.select %79, %77, %80 : vector<4x512xi1>, vector<4x512xf32>
    %cst_26 = arith.constant dense<0.000000e+00> : vector<4x512xf32>
    %82 = tpu.matmul %3, %81, %cst_26 {dimension_numbers = #tpu.dot_dimension_numbers<[1], [0], [0], [1], [0, 0, 1, 1], [], []>} : vector<4x4xf32>, vector<4x512xf32>, vector<4x512xf32> -> vector<4x512xf32>
    %83 = arith.addf %76, %82 : vector<4x512xf32>
    %c1_i32_27 = arith.constant 1 : i32
    %84 = tpu.dynamic_rotate %62 by %c1_i32_27 dim 1 : vector<4x512xf32>, i32 -> vector<4x512xf32>
    %cst_28 = arith.constant 0.000000e+00 : f32
    %85 = vector.shape_cast %37 : vector<1x512xi1> to vector<1x512xi1>
    %86 = vector.broadcast %85 : vector<1x512xi1> to vector<4x512xi1>
    %87 = vector.broadcast %cst_28 : f32 to vector<4x512xf32>
    %88 = arith.select %86, %84, %87 : vector<4x512xi1>, vector<4x512xf32>
    %cst_29 = arith.constant dense<0.000000e+00> : vector<4x512xf32>
    %89 = tpu.matmul %4, %88, %cst_29 {dimension_numbers = #tpu.dot_dimension_numbers<[1], [0], [0], [1], [0, 0, 1, 1], [], []>} : vector<4x4xf32>, vector<4x512xf32>, vector<4x512xf32> -> vector<4x512xf32>
    %90 = arith.addf %83, %89 : vector<4x512xf32>
    %cst_30 = arith.constant dense<0.000000e+00> : vector<4x512xf32>
    %91 = tpu.matmul %5, %62, %cst_30 {dimension_numbers = #tpu.dot_dimension_numbers<[1], [0], [0], [1], [0, 0, 1, 1], [], []>} : vector<4x4xf32>, vector<4x512xf32>, vector<4x512xf32> -> vector<4x512xf32>
    %92 = arith.addf %90, %91 : vector<4x512xf32>
    %c511_i32 = arith.constant 511 : i32
    %93 = tpu.dynamic_rotate %62 by %c511_i32 dim 1 : vector<4x512xf32>, i32 -> vector<4x512xf32>
    %cst_31 = arith.constant 0.000000e+00 : f32
    %94 = vector.shape_cast %43 : vector<1x512xi1> to vector<1x512xi1>
    %95 = vector.broadcast %94 : vector<1x512xi1> to vector<4x512xi1>
    %96 = vector.broadcast %cst_31 : f32 to vector<4x512xf32>
    %97 = arith.select %95, %93, %96 : vector<4x512xi1>, vector<4x512xf32>
    %cst_32 = arith.constant dense<0.000000e+00> : vector<4x512xf32>
    %98 = tpu.matmul %6, %97, %cst_32 {dimension_numbers = #tpu.dot_dimension_numbers<[1], [0], [0], [1], [0, 0, 1, 1], [], []>} : vector<4x4xf32>, vector<4x512xf32>, vector<4x512xf32> -> vector<4x512xf32>
    %99 = arith.addf %92, %98 : vector<4x512xf32>
    %c497_i32 = arith.constant 497 : i32
    %100 = tpu.dynamic_rotate %62 by %c497_i32 dim 1 : vector<4x512xf32>, i32 -> vector<4x512xf32>
    %cst_33 = arith.constant 0.000000e+00 : f32
    %101 = vector.shape_cast %49 : vector<1x512xi1> to vector<1x512xi1>
    %102 = vector.broadcast %101 : vector<1x512xi1> to vector<4x512xi1>
    %103 = vector.broadcast %cst_33 : f32 to vector<4x512xf32>
    %104 = arith.select %102, %100, %103 : vector<4x512xi1>, vector<4x512xf32>
    %cst_34 = arith.constant dense<0.000000e+00> : vector<4x512xf32>
    %105 = tpu.matmul %7, %104, %cst_34 {dimension_numbers = #tpu.dot_dimension_numbers<[1], [0], [0], [1], [0, 0, 1, 1], [], []>} : vector<4x4xf32>, vector<4x512xf32>, vector<4x512xf32> -> vector<4x512xf32>
    %106 = arith.addf %99, %105 : vector<4x512xf32>
    %c496_i32 = arith.constant 496 : i32
    %107 = tpu.dynamic_rotate %62 by %c496_i32 dim 1 : vector<4x512xf32>, i32 -> vector<4x512xf32>
    %cst_35 = arith.constant 0.000000e+00 : f32
    %108 = vector.shape_cast %55 : vector<1x512xi1> to vector<1x512xi1>
    %109 = vector.broadcast %108 : vector<1x512xi1> to vector<4x512xi1>
    %110 = vector.broadcast %cst_35 : f32 to vector<4x512xf32>
    %111 = arith.select %109, %107, %110 : vector<4x512xi1>, vector<4x512xf32>
    %cst_36 = arith.constant dense<0.000000e+00> : vector<4x512xf32>
    %112 = tpu.matmul %8, %111, %cst_36 {dimension_numbers = #tpu.dot_dimension_numbers<[1], [0], [0], [1], [0, 0, 1, 1], [], []>} : vector<4x4xf32>, vector<4x512xf32>, vector<4x512xf32> -> vector<4x512xf32>
    %113 = arith.addf %106, %112 : vector<4x512xf32>
    %c495_i32 = arith.constant 495 : i32
    %114 = tpu.dynamic_rotate %62 by %c495_i32 dim 1 : vector<4x512xf32>, i32 -> vector<4x512xf32>
    %cst_37 = arith.constant 0.000000e+00 : f32
    %115 = vector.shape_cast %61 : vector<1x512xi1> to vector<1x512xi1>
    %116 = vector.broadcast %115 : vector<1x512xi1> to vector<4x512xi1>
    %117 = vector.broadcast %cst_37 : f32 to vector<4x512xf32>
    %118 = arith.select %116, %114, %117 : vector<4x512xi1>, vector<4x512xf32>
    %cst_38 = arith.constant dense<0.000000e+00> : vector<4x512xf32>
    %119 = tpu.matmul %9, %118, %cst_38 {dimension_numbers = #tpu.dot_dimension_numbers<[1], [0], [0], [1], [0, 0, 1, 1], [], []>} : vector<4x4xf32>, vector<4x512xf32>, vector<4x512xf32> -> vector<4x512xf32>
    %120 = arith.addf %113, %119 : vector<4x512xf32>
    %121 = arith.addf %62, %120 : vector<4x512xf32>
    %c0_39 = arith.constant 0 : index
    %c0_40 = arith.constant 0 : index
    %122 = vector.load %arg4[%c0_39, %c0_40] : memref<4x512xf32, #tpu.memory_space<vmem>>, vector<4x512xf32>
    tpu.vector_store %arg4[%c0_39, %c0_40], %121 {strides = array<i32>} : memref<4x512xf32, #tpu.memory_space<vmem>>, vector<4x512xf32>,
    return
  }
  func.func @transform_0(%arg0: i32) -> (i32, i32) {
    %c0_i32 = arith.constant 0 : i32
    %c0_i32_0 = arith.constant 0 : i32
    return %c0_i32, %arg0 : i32, i32
  }
  func.func @transform_1(%arg0: i32) -> (i32, i32) {
    %c0_i32 = arith.constant 0 : i32
    %c0_i32_0 = arith.constant 0 : i32
    return %c0_i32, %arg0 : i32, i32
  }
  func.func @transform_2(%arg0: i32) -> (i32, i32) {
    %c0_i32 = arith.constant 0 : i32
    %c0_i32_0 = arith.constant 0 : i32
    %c0_i32_1 = arith.constant 0 : i32
    return %c0_i32, %c0_i32_0 : i32, i32
  }
  func.func @transform_3(%arg0: i32) -> (i32, i32) {
    %c0_i32 = arith.constant 0 : i32
    %c0_i32_0 = arith.constant 0 : i32
    return %c0_i32, %arg0 : i32, i32
  }
}

</mosaic_0001>

<llo_original>
// kernel: tpu_custom_call.1
$region0: #{tpu_custom_call.1}
  #allocation0 [shape = 'u32[]', space=smem, size = 0x4, offset = 0x4, fixed_abs, tag = 'smem constant byte address 0x4 - core index']
  #allocation1 [shape = 'u32[144,128]{1,0:T(1,128)}', space=vmem, size = 0x12000, scoped, tag = 'internal scratch']
  %s0 = inlined_call_operand.hbm [shape: f32[4,512], index: 0, kind: input, shape index: {}]
  %s1 = inlined_call_operand.hbm [shape: s32[1,512], index: 1, kind: input, shape index: {}]
  %s2 = inlined_call_operand.vmem [shape: f32[4,37], index: 2, kind: input, shape index: {}]
  %s3 = inlined_call_operand.hbm [shape: f32[4,512], index: 3, kind: output, shape index: {}]
  %s4 = sld [smem:[#allocation0]]
  $region30: #{tpu_custom_call.1} parent=0
    _
  %s6 = ssub.s32 1, %s4
  %s7 = scalar_select 0, %s6, %s4
  $region1: #{tpu_custom_call.1} parent=0
    #allocation2 [shape = 'u8[8192]{0}', space=vmem, size = 0x2000, scoped, tag = 'input window, operand 0, single buffered']
    #allocation3 [shape = 's32[1]{0}', space=sflag, size = 0x4, scoped, tag = 'scoped memory for tpu_custom_call.1']
    #allocation4 [shape = 's32[1]{0}', space=sflag, size = 0x4, scoped, tag = 'scoped memory for tpu_custom_call.1']
    #allocation5 [shape = 'u8[2048]{0}', space=vmem, size = 0x800, scoped, tag = 'input window, operand 1, single buffered']
    #allocation6 [shape = 's32[1]{0}', space=sflag, size = 0x4, scoped, tag = 'scoped memory for tpu_custom_call.1']
    #allocation7 [shape = 'u8[8192]{0}', space=vmem, size = 0x2000, scoped, tag = 'output window, operand 0, single buffered']
    %8 = vsyncpa [#allocation3], 0
    %9 = vsyncpa [#allocation6], 0
    %10 = vsyncpa [#allocation4], 0
    // Predicated region
    $region2: #{tpu_custom_call.1} parent=1 // pred_check
      _
    $region3: #{tpu_custom_call.1} parent=1 // pred_check_branch
      %12 = sbr.rel (0) target = $region5
    $region4: #{tpu_custom_call.1} parent=1 // pred_region
      %s14 = ssub.s32 256, 256
      %15 = vsyncadd [#allocation3], %s14
      %s17 = sshll.u32 [#allocation2], 4
      %s18 = int_to_ptr.vmem [resolvable:$true] %s17
      %20 = dma.hbm_to_vmem [thread:$0]  %s0, 256, %s18, [#allocation3]
    $region5: #{tpu_custom_call.1} parent=1 // pred_fallthru
      _
    // Predicated region
    $region6: #{tpu_custom_call.1} parent=1 // pred_check
      _
    $region7: #{tpu_custom_call.1} parent=1 // pred_check_branch
      %22 = sbr.rel (0) target = $region9
    $region8: #{tpu_custom_call.1} parent=1 // pred_region
      %s24 = ssub.s32 64, 64
      %25 = vsyncadd [#allocation6], %s24
      %s27 = sshll.u32 [#allocation5], 4
      %s28 = int_to_ptr.vmem [resolvable:$true] %s27
      %30 = dma.hbm_to_vmem [thread:$0]  %s1, 64, %s28, [#allocation6]
    $region9: #{tpu_custom_call.1} parent=1 // pred_fallthru
      _
    // Predicated region
    $region10: #{tpu_custom_call.1} parent=1 // pred_check
      _
    $region11: #{tpu_custom_call.1} parent=1 // pred_check_branch
      %32 = sbr.rel (0) target = $region13
    $region12: #{tpu_custom_call.1} parent=1 // pred_region
      _
    $region13: #{tpu_custom_call.1} parent=1 // pred_fallthru
      _
    // Predicated region
    $region14: #{tpu_custom_call.1} parent=1 // pred_check
      _
    $region15: #{tpu_custom_call.1} parent=1 // pred_check_branch
      %34 = sbr.rel (0) target = $region17
    $region16: #{tpu_custom_call.1} parent=1 // pred_region
      %35 = dma.done [#allocation3], 256
    $region17: #{tpu_custom_call.1} parent=1 // pred_fallthru
      _
    // Predicated region
    $region18: #{tpu_custom_call.1} parent=1 // pred_check
      _
    $region19: #{tpu_custom_call.1} parent=1 // pred_check_branch
      %37 = sbr.rel (0) target = $region21
    $region20: #{tpu_custom_call.1} parent=1 // pred_region
      %38 = dma.done [#allocation6], 64
    $region21: #{tpu_custom_call.1} parent=1 // pred_fallthru
      _
    %v39 = vld [vmem:[%s2] sm:$0xf]
    %41 = vset.pattern.permute.xlu0 36
    %42 = vperm.xlu0 %41, %v39
    %v43 = vpop.permute.xlu0 %42
    %v45 = vld [vmem:[#allocation5] sm:$0xf]
    %v46 = vand.u32 %v45, 1
    %vm47 = vcmp.ne.s32.totalorder %v46, 0
    %v48 = vshra.s32 %v45, 1
    %v49 = vand.u32 %v48, 1
    %vm50 = vcmp.ne.s32.totalorder %v49, 0
    %v51 = vshra.s32 %v45, 2
    %v52 = vand.u32 %v51, 1
    %vm53 = vcmp.ne.s32.totalorder %v52, 0
    %v54 = vshra.s32 %v45, 3
    %v55 = vand.u32 %v54, 1
    %vm56 = vcmp.ne.s32.totalorder %v55, 0
    %v57 = vshra.s32 %v45, 5
    %v58 = vand.u32 %v57, 1
    %vm59 = vcmp.ne.s32.totalorder %v58, 0
    %v60 = vshra.s32 %v45, 6
    %v61 = vand.u32 %v60, 1
    %vm62 = vcmp.ne.s32.totalorder %v61, 0
    %v63 = vshra.s32 %v45, 7
    %v64 = vand.u32 %v63, 1
    %vm65 = vcmp.ne.s32.totalorder %v64, 0
    %v66 = vshra.s32 %v45, 8
    %v67 = vand.u32 %v66, 1
    %vm68 = vcmp.ne.s32.totalorder %v67, 0
    %v69 = vld [vmem:[#allocation2] sm:$0xff]
    %v70 = vld [vmem:[#allocation2 + $0x8] sm:$0xff]
    %v73 = vcombine.high %v69, %v69
    %v74 = vcombine.high %v70, %v70
    %77 = vrot.lane.b32.xlu0 %v69, 17
    %v78 = vpop.permute.xlu0 %77
    %79 = vrot.lane.b32.xlu0 %v73, 17
    %v80 = vpop.permute.xlu0 %79
    %81 = vrot.lane.b32.xlu0 %v70, 17
    %v82 = vpop.permute.xlu0 %81
    %83 = vrot.lane.b32.xlu0 %v74, 17
    %v84 = vpop.permute.xlu0 %83
    %v85 = vlaneseq
    %v86 = vand.u32 %v85, 127
    %vm87 = vcmp.lt.s32.totalorder %v86, 17
    %v88 = vsel %vm87, %v82, %v84
    %v89 = vsel %vm87, %v80, %v82
    %v90 = vsel %vm87, %v78, %v80
    %v91 = vsel %vm87, %v84, %v78
    %v92 = vsel %vm47, 1, 0
    %v93 = vlaneseq
    %v94 = vshrl.u32 %v93, 7
    %v95 = vsub.s32 0, %v94
    %v96 = vrot.slane %v92, %v95
    %v97 = vlaneseq
    %v98 = vshrl.u32 %v97, 7
    %v99 = vsub.s32 1, %v98
    %v100 = vrot.slane %v92, %v99
    %v101 = vlaneseq
    %v102 = vshrl.u32 %v101, 7
    %v103 = vsub.s32 2, %v102
    %v104 = vrot.slane %v92, %v103
    %v105 = vlaneseq
    %v106 = vshrl.u32 %v105, 7
    %v107 = vsub.s32 3, %v106
    %v108 = vrot.slane %v92, %v107
    %vm109 = vcmp.eq.s32.totalorder %v96, 1
    %vm110 = vcmp.eq.s32.totalorder %v100, 1
    %vm111 = vcmp.eq.s32.totalorder %v104, 1
    %vm112 = vcmp.eq.s32.totalorder %v108, 1
    %v113 = vsel %vm109, %v91, 0.0
    %v114 = vsel %vm110, %v90, 0.0
    %v115 = vsel %vm111, %v89, 0.0
    %v116 = vsel %vm112, %v88, 0.0
    %vm117 = vcmask 31744
    %v118 = vsel %vm117, %v39, 0
    %vm120 = vcmask 1043456
    %v122 = vsel %vm120, %v113, 0
    %v125 = vsel %vm120, %v114, 0
    %v128 = vsel %vm120, %v115, 0
    %v131 = vsel %vm120, %v116, 0
    %133 = vmatprep.subr.mxu0 %v125
    %134 = vmatpush1.msra.mxu0 %v122
    %135 = vmatprep.subr.mxu0 0.0
    %136 = vmatpush1.msra.mxu0 0.0
    %137 = vmatprep.subr.mxu0 0.0
    %138 = vmatpush1.msra.mxu0 0.0
    %139 = vmatprep.subr.mxu0 0.0
    %140 = vmatpush1.msra.mxu0 0.0
    %141 = vmatprep.subr.mxu0 0.0
    %142 = vmatpush1.msra.mxu0 0.0
    %143 = vmatprep.subr.mxu0 0.0
    %144 = vmatpush1.msra.mxu0 0.0
    %145 = vmatprep.subr.mxu0 0.0
    %146 = vmatpush1.msra.mxu0 0.0
    %147 = vmatprep.subr.mxu0 0.0
    %148 = vmatpush1.msra.mxu0 0.0
    %149 = vmatprep.subr.mxu0 0.0
    %150 = vmatpush1.msra.mxu0 0.0
    %151 = vmatprep.subr.mxu0 0.0
    %152 = vmatpush1.msra.mxu0 0.0
    %153 = vmatprep.subr.mxu0 0.0
    %154 = vmatpush1.msra.mxu0 0.0
    %155 = vmatprep.subr.mxu0 0.0
    %156 = vmatpush1.msra.mxu0 0.0
    %157 = vmatprep.subr.mxu0 0.0
    %158 = vmatpush1.msra.mxu0 0.0
    %159 = vmatprep.subr.mxu0 0.0
    %160 = vmatpush1.msra.mxu0 0.0
    %161 = vmatprep.subr.mxu0 0.0
    %162 = vmatpush1.msra.mxu0 0.0
    %163 = vmatprep.subr.mxu0 0.0
    %164 = vmatpush1.msra.mxu0 0.0
    %165 = vmatprep.subr.mxu0 0.0
    %166 = vmatpush1.msra.mxu0 0.0
    %167 = vmatprep.subr.mxu0 0.0
    %168 = vmatpush1.msra.mxu0 0.0
    %169 = vmatprep.subr.mxu0 0.0
    %170 = vmatpush1.msra.mxu0 0.0
    %171 = vmatprep.subr.mxu0 0.0
    %172 = vmatpush1.msra.mxu0 0.0
    %173 = vmatprep.subr.mxu0 0.0
    %174 = vmatpush1.msra.mxu0 0.0
    %175 = vmatprep.subr.mxu0 0.0
    %176 = vmatpush1.msra.mxu0 0.0
    %177 = vmatprep.subr.mxu0 0.0
    %178 = vmatpush1.msra.mxu0 0.0
    %179 = vmatprep.subr.mxu0 0.0
    %180 = vmatpush1.msra.mxu0 0.0
    %181 = vmatprep.subr.mxu0 0.0
    %182 = vmatpush1.msra.mxu0 0.0
    %183 = vmatprep.subr.mxu0 0.0
    %184 = vmatpush1.msra.mxu0 0.0
    %185 = vmatprep.subr.mxu0 0.0
    %186 = vmatpush1.msra.mxu0 0.0
    %187 = vmatprep.subr.mxu0 0.0
    %188 = vmatpush1.msra.mxu0 0.0
    %189 = vmatprep.subr.mxu0 0.0
    %190 = vmatpush1.msra.mxu0 0.0
    %191 = vmatprep.subr.mxu0 0.0
    %192 = vmatpush1.msra.mxu0 0.0
    %193 = vmatprep.subr.mxu0 0.0
    %194 = vmatpush1.msra.mxu0 0.0
    %195 = vmatprep.subr.mxu0 0.0
    %196 = vmatpush1.msra.mxu0 0.0
    %197 = vmatprep.mubr.f32.mxu0 0.0
    %198 = vmatmul.mubr.f32.gmra.mrb[0].mxu0 %v118
    %v199 = vpop.f32.mrb[0].mxu0
    %v200 = vadd.f32 0.0, %v199
    %v201 = vpop.f32.mrb[0].mxu0
    %v202 = vadd.f32 0.0, %v201
    %203 = vdwg.mxu0
    %204 = vmatprep.subr.mxu0 %v131
    %205 = vmatpush1.msra.mxu0 %v128
    %206 = vmatprep.subr.mxu0 0.0
    %207 = vmatpush1.msra.mxu0 0.0
    %208 = vmatprep.subr.mxu0 0.0
    %209 = vmatpush1.msra.mxu0 0.0
    %210 = vmatprep.subr.mxu0 0.0
    %211 = vmatpush1.msra.mxu0 0.0
    %212 = vmatprep.subr.mxu0 0.0
    %213 = vmatpush1.msra.mxu0 0.0
    %214 = vmatprep.subr.mxu0 0.0
    %215 = vmatpush1.msra.mxu0 0.0
    %216 = vmatprep.subr.mxu0 0.0
    %217 = vmatpush1.msra.mxu0 0.0
    %218 = vmatprep.subr.mxu0 0.0
    %219 = vmatpush1.msra.mxu0 0.0
    %220 = vmatprep.subr.mxu0 0.0
    %221 = vmatpush1.msra.mxu0 0.0
    %222 = vmatprep.subr.mxu0 0.0
    %223 = vmatpush1.msra.mxu0 0.0
    %224 = vmatprep.subr.mxu0 0.0
    %225 = vmatpush1.msra.mxu0 0.0
    %226 = vmatprep.subr.mxu0 0.0
    %227 = vmatpush1.msra.mxu0 0.0
    %228 = vmatprep.subr.mxu0 0.0
    %229 = vmatpush1.msra.mxu0 0.0
    %230 = vmatprep.subr.mxu0 0.0
    %231 = vmatpush1.msra.mxu0 0.0
    %232 = vmatprep.subr.mxu0 0.0
    %233 = vmatpush1.msra.mxu0 0.0
    %234 = vmatprep.subr.mxu0 0.0
    %235 = vmatpush1.msra.mxu0 0.0
    %236 = vmatprep.subr.mxu0 0.0
    %237 = vmatpush1.msra.mxu0 0.0
    %238 = vmatprep.subr.mxu0 0.0
    %239 = vmatpush1.msra.mxu0 0.0
    %240 = vmatprep.subr.mxu0 0.0
    %241 = vmatpush1.msra.mxu0 0.0
    %242 = vmatprep.subr.mxu0 0.0
    %243 = vmatpush1.msra.mxu0 0.0
    %244 = vmatprep.subr.mxu0 0.0
    %245 = vmatpush1.msra.mxu0 0.0
    %246 = vmatprep.subr.mxu0 0.0
    %247 = vmatpush1.msra.mxu0 0.0
    %248 = vmatprep.subr.mxu0 0.0
    %249 = vmatpush1.msra.mxu0 0.0
    %250 = vmatprep.subr.mxu0 0.0
    %251 = vmatpush1.msra.mxu0 0.0
    %252 = vmatprep.subr.mxu0 0.0
    %253 = vmatpush1.msra.mxu0 0.0
    %254 = vmatprep.subr.mxu0 0.0
    %255 = vmatpush1.msra.mxu0 0.0
    %256 = vmatprep.subr.mxu0 0.0
    %257 = vmatpush1.msra.mxu0 0.0
    %258 = vmatprep.subr.mxu0 0.0
    %259 = vmatpush1.msra.mxu0 0.0
    %260 = vmatprep.subr.mxu0 0.0
    %261 = vmatpush1.msra.mxu0 0.0
    %262 = vmatprep.subr.mxu0 0.0
    %263 = vmatpush1.msra.mxu0 0.0
    %264 = vmatprep.subr.mxu0 0.0
    %265 = vmatpush1.msra.mxu0 0.0
    %266 = vmatprep.subr.mxu0 0.0
    %267 = vmatpush1.msra.mxu0 0.0
    %268 = vmatprep.mubr.f32.mxu0 0.0
    %269 = vmatmul.mubr.f32.gmra.mrb[0].mxu0 %v118
    %v270 = vpop.f32.mrb[0].mxu0
    %v271 = vadd.f32 0.0, %v270
    %v272 = vpop.f32.mrb[0].mxu0
    %v273 = vadd.f32 0.0, %v272
    %274 = vdwg.mxu0
    %v275 = vadd.f32 %v43, %v200
    %v276 = vadd.f32 %v43, %v202
    %v277 = vadd.f32 %v43, %v271
    %v278 = vadd.f32 %v43, %v273
    %279 = vrot.lane.b32.xlu0 %v69, 16
    %v280 = vpop.permute.xlu0 %279
    %281 = vrot.lane.b32.xlu0 %v73, 16
    %v282 = vpop.permute.xlu0 %281
    %283 = vrot.lane.b32.xlu0 %v70, 16
    %v284 = vpop.permute.xlu0 %283
    %285 = vrot.lane.b32.xlu0 %v74, 16
    %v286 = vpop.permute.xlu0 %285
    %vm287 = vcmp.lt.s32.totalorder %v86, 16
    %v288 = vsel %vm287, %v284, %v286
    %v289 = vsel %vm287, %v282, %v284
    %v290 = vsel %vm287, %v280, %v282
    %v291 = vsel %vm287, %v286, %v280
    %v292 = vsel %vm50, 1, 0
    %v293 = vlaneseq
    %v294 = vshrl.u32 %v293, 7
    %v295 = vsub.s32 0, %v294
    %v296 = vrot.slane %v292, %v295
    %v297 = vlaneseq
    %v298 = vshrl.u32 %v297, 7
    %v299 = vsub.s32 1, %v298
    %v300 = vrot.slane %v292, %v299
    %v301 = vlaneseq
    %v302 = vshrl.u32 %v301, 7
    %v303 = vsub.s32 2, %v302
    %v304 = vrot.slane %v292, %v303
    %v305 = vlaneseq
    %v306 = vshrl.u32 %v305, 7
    %v307 = vsub.s32 3, %v306
    %v308 = vrot.slane %v292, %v307
    %vm309 = vcmp.eq.s32.totalorder %v296, 1
    %vm310 = vcmp.eq.s32.totalorder %v300, 1
    %vm311 = vcmp.eq.s32.totalorder %v304, 1
    %vm312 = vcmp.eq.s32.totalorder %v308, 1
    %v313 = vsel %vm309, %v291, 0.0
    %v314 = vsel %vm310, %v290, 0.0
    %v315 = vsel %vm311, %v289, 0.0
    %v316 = vsel %vm312, %v288, 0.0
    %317 = vrot.lane.b32.xlu0 %v39, 124
    %v318 = vpop.permute.xlu0 %317
    %v319 = vsel %vm117, %v318, 0
    %v322 = vsel %vm120, %v313, 0
    %v325 = vsel %vm120, %v314, 0
    %v328 = vsel %vm120, %v315, 0
    %v331 = vsel %vm120, %v316, 0
    %333 = vmatprep.subr.mxu0 %v325
    %334 = vmatpush1.msra.mxu0 %v322
    %335 = vmatprep.subr.mxu0 0.0
    %336 = vmatpush1.msra.mxu0 0.0
    %337 = vmatprep.subr.mxu0 0.0
    %338 = vmatpush1.msra.mxu0 0.0
    %339 = vmatprep.subr.mxu0 0.0
    %340 = vmatpush1.msra.mxu0 0.0
    %341 = vmatprep.subr.mxu0 0.0
    %342 = vmatpush1.msra.mxu0 0.0
    %343 = vmatprep.subr.mxu0 0.0
    %344 = vmatpush1.msra.mxu0 0.0
    %345 = vmatprep.subr.mxu0 0.0
    %346 = vmatpush1.msra.mxu0 0.0
    %347 = vmatprep.subr.mxu0 0.0
    %348 = vmatpush1.msra.mxu0 0.0
    %349 = vmatprep.subr.mxu0 0.0
    %350 = vmatpush1.msra.mxu0 0.0
    %351 = vmatprep.subr.mxu0 0.0
    %352 = vmatpush1.msra.mxu0 0.0
    %353 = vmatprep.subr.mxu0 0.0
    %354 = vmatpush1.msra.mxu0 0.0
    %355 = vmatprep.subr.mxu0 0.0
    %356 = vmatpush1.msra.mxu0 0.0
    %357 = vmatprep.subr.mxu0 0.0
    %358 = vmatpush1.msra.mxu0 0.0
    %359 = vmatprep.subr.mxu0 0.0
    %360 = vmatpush1.msra.mxu0 0.0
    %361 = vmatprep.subr.mxu0 0.0
    %362 = vmatpush1.msra.mxu0 0.0
    %363 = vmatprep.subr.mxu0 0.0
    %364 = vmatpush1.msra.mxu0 0.0
    %365 = vmatprep.subr.mxu0 0.0
    %366 = vmatpush1.msra.mxu0 0.0
    %367 = vmatprep.subr.mxu0 0.0
    %368 = vmatpush1.msra.mxu0 0.0
    %369 = vmatprep.subr.mxu0 0.0
    %370 = vmatpush1.msra.mxu0 0.0
    %371 = vmatprep.subr.mxu0 0.0
    %372 = vmatpush1.msra.mxu0 0.0
    %373 = vmatprep.subr.mxu0 0.0
    %374 = vmatpush1.msra.mxu0 0.0
    %375 = vmatprep.subr.mxu0 0.0
    %376 = vmatpush1.msra.mxu0 0.0
    %377 = vmatprep.subr.mxu0 0.0
    %378 = vmatpush1.msra.mxu0 0.0
    %379 = vmatprep.subr.mxu0 0.0
    %380 = vmatpush1.msra.mxu0 0.0
    %381 = vmatprep.subr.mxu0 0.0
    %382 = vmatpush1.msra.mxu0 0.0
    %383 = vmatprep.subr.mxu0 0.0
    %384 = vmatpush1.msra.mxu0 0.0
    %385 = vmatprep.subr.mxu0 0.0
    %386 = vmatpush1.msra.mxu0 0.0
    %387 = vmatprep.subr.mxu0 0.0
    %388 = vmatpush1.msra.mxu0 0.0
    %389 = vmatprep.subr.mxu0 0.0
    %390 = vmatpush1.msra.mxu0 0.0
    %391 = vmatprep.subr.mxu0 0.0
    %392 = vmatpush1.msra.mxu0 0.0
    %393 = vmatprep.subr.mxu0 0.0
    %394 = vmatpush1.msra.mxu0 0.0
    %395 = vmatprep.subr.mxu0 0.0
    %396 = vmatpush1.msra.mxu0 0.0
    %397 = vmatprep.mubr.f32.mxu0 0.0
    %398 = vmatmul.mubr.f32.gmra.mrb[0].mxu0 %v319
    %v399 = vpop.f32.mrb[0].mxu0
    %v400 = vadd.f32 0.0, %v399
    %v401 = vpop.f32.mrb[0].mxu0
    %v402 = vadd.f32 0.0, %v401
    %403 = vdwg.mxu0
    %404 = vmatprep.subr.mxu0 %v331
    %405 = vmatpush1.msra.mxu0 %v328
    %406 = vmatprep.subr.mxu0 0.0
    %407 = vmatpush1.msra.mxu0 0.0
    %408 = vmatprep.subr.mxu0 0.0
    %409 = vmatpush1.msra.mxu0 0.0
    %410 = vmatprep.subr.mxu0 0.0
    %411 = vmatpush1.msra.mxu0 0.0
    %412 = vmatprep.subr.mxu0 0.0
    %413 = vmatpush1.msra.mxu0 0.0
    %414 = vmatprep.subr.mxu0 0.0
    %415 = vmatpush1.msra.mxu0 0.0
    %416 = vmatprep.subr.mxu0 0.0
    %417 = vmatpush1.msra.mxu0 0.0
    %418 = vmatprep.subr.mxu0 0.0
    %419 = vmatpush1.msra.mxu0 0.0
    %420 = vmatprep.subr.mxu0 0.0
    %421 = vmatpush1.msra.mxu0 0.0
    %422 = vmatprep.subr.mxu0 0.0
    %423 = vmatpush1.msra.mxu0 0.0
    %424 = vmatprep.subr.mxu0 0.0
    %425 = vmatpush1.msra.mxu0 0.0
    %426 = vmatprep.subr.mxu0 0.0
    %427 = vmatpush1.msra.mxu0 0.0
    %428 = vmatprep.subr.mxu0 0.0
    %429 = vmatpush1.msra.mxu0 0.0
    %430 = vmatprep.subr.mxu0 0.0
    %431 = vmatpush1.msra.mxu0 0.0
    %432 = vmatprep.subr.mxu0 0.0
    %433 = vmatpush1.msra.mxu0 0.0
    %434 = vmatprep.subr.mxu0 0.0
    %435 = vmatpush1.msra.mxu0 0.0
    %436 = vmatprep.subr.mxu0 0.0
    %437 = vmatpush1.msra.mxu0 0.0
    %438 = vmatprep.subr.mxu0 0.0
    %439 = vmatpush1.msra.mxu0 0.0
    %440 = vmatprep.subr.mxu0 0.0
    %441 = vmatpush1.msra.mxu0 0.0
    %442 = vmatprep.subr.mxu0 0.0
    %443 = vmatpush1.msra.mxu0 0.0
    %444 = vmatprep.subr.mxu0 0.0
    %445 = vmatpush1.msra.mxu0 0.0
    %446 = vmatprep.subr.mxu0 0.0
    %447 = vmatpush1.msra.mxu0 0.0
    %448 = vmatprep.subr.mxu0 0.0
    %449 = vmatpush1.msra.mxu0 0.0
    %450 = vmatprep.subr.mxu0 0.0
    %451 = vmatpush1.msra.mxu0 0.0
    %452 = vmatprep.subr.mxu0 0.0
    %453 = vmatpush1.msra.mxu0 0.0
    %454 = vmatprep.subr.mxu0 0.0
    %455 = vmatpush1.msra.mxu0 0.0
    %456 = vmatprep.subr.mxu0 0.0
    %457 = vmatpush1.msra.mxu0 0.0
    %458 = vmatprep.subr.mxu0 0.0
    %459 = vmatpush1.msra.mxu0 0.0
    %460 = vmatprep.subr.mxu0 0.0
    %461 = vmatpush1.msra.mxu0 0.0
    %462 = vmatprep.subr.mxu0 0.0
    %463 = vmatpush1.msra.mxu0 0.0
    %464 = vmatprep.subr.mxu0 0.0
    %465 = vmatpush1.msra.mxu0 0.0
    %466 = vmatprep.subr.mxu0 0.0
    %467 = vmatpush1.msra.mxu0 0.0
    %468 = vmatprep.mubr.f32.mxu0 0.0
    %469 = vmatmul.mubr.f32.gmra.mrb[0].mxu0 %v319
    %v470 = vpop.f32.mrb[0].mxu0
    %v471 = vadd.f32 0.0, %v470
    %v472 = vpop.f32.mrb[0].mxu0
    %v473 = vadd.f32 0.0, %v472
    %474 = vdwg.mxu0
    %v475 = vadd.f32 %v275, %v400
    %v476 = vadd.f32 %v276, %v402
    %v477 = vadd.f32 %v277, %v471
    %v478 = vadd.f32 %v278, %v473
    %479 = vrot.lane.b32.xlu0 %v69, 15
    %v480 = vpop.permute.xlu0 %479
    %481 = vrot.lane.b32.xlu0 %v73, 15
    %v482 = vpop.permute.xlu0 %481
    %483 = vrot.lane.b32.xlu0 %v70, 15
    %v484 = vpop.permute.xlu0 %483
    %485 = vrot.lane.b32.xlu0 %v74, 15
    %v486 = vpop.permute.xlu0 %485
    %vm487 = vcmp.lt.s32.totalorder %v86, 15
    %v488 = vsel %vm487, %v484, %v486
    %v489 = vsel %vm487, %v482, %v484
    %v490 = vsel %vm487, %v480, %v482
    %v491 = vsel %vm487, %v486, %v480
    %v492 = vsel %vm53, 1, 0
    %v493 = vlaneseq
    %v494 = vshrl.u32 %v493, 7
    %v495 = vsub.s32 0, %v494
    %v496 = vrot.slane %v492, %v495
    %v497 = vlaneseq
    %v498 = vshrl.u32 %v497, 7
    %v499 = vsub.s32 1, %v498
    %v500 = vrot.slane %v492, %v499
    %v501 = vlaneseq
    %v502 = vshrl.u32 %v501, 7
    %v503 = vsub.s32 2, %v502
    %v504 = vrot.slane %v492, %v503
    %v505 = vlaneseq
    %v506 = vshrl.u32 %v505, 7
    %v507 = vsub.s32 3, %v506
    %v508 = vrot.slane %v492, %v507
    %vm509 = vcmp.eq.s32.totalorder %v496, 1
    %vm510 = vcmp.eq.s32.totalorder %v500, 1
    %vm511 = vcmp.eq.s32.totalorder %v504, 1
    %vm512 = vcmp.eq.s32.totalorder %v508, 1
    %v513 = vsel %vm509, %v491, 0.0
    %v514 = vsel %vm510, %v490, 0.0
    %v515 = vsel %vm511, %v489, 0.0
    %v516 = vsel %vm512, %v488, 0.0
    %517 = vrot.lane.b32.xlu0 %v39, 120
    %v518 = vpop.permute.xlu0 %517
    %v519 = vsel %vm117, %v518, 0
    %v522 = vsel %vm120, %v513, 0
    %v525 = vsel %vm120, %v514, 0
    %v528 = vsel %vm120, %v515, 0
    %v531 = vsel %vm120, %v516, 0
    %533 = vmatprep.subr.mxu0 %v525
    %534 = vmatpush1.msra.mxu0 %v522
    %535 = vmatprep.subr.mxu0 0.0
    %536 = vmatpush1.msra.mxu0 0.0
    %537 = vmatprep.subr.mxu0 0.0
    %538 = vmatpush1.msra.mxu0 0.0
    %539 = vmatprep.subr.mxu0 0.0
    %540 = vmatpush1.msra.mxu0 0.0
    %541 = vmatprep.subr.mxu0 0.0
    %542 = vmatpush1.msra.mxu0 0.0
    %543 = vmatprep.subr.mxu0 0.0
    %544 = vmatpush1.msra.mxu0 0.0
    %545 = vmatprep.subr.mxu0 0.0
    %546 = vmatpush1.msra.mxu0 0.0
    %547 = vmatprep.subr.mxu0 0.0
    %548 = vmatpush1.msra.mxu0 0.0
    %549 = vmatprep.subr.mxu0 0.0
    %550 = vmatpush1.msra.mxu0 0.0
    %551 = vmatprep.subr.mxu0 0.0
    %552 = vmatpush1.msra.mxu0 0.0
    %553 = vmatprep.subr.mxu0 0.0
    %554 = vmatpush1.msra.mxu0 0.0
    %555 = vmatprep.subr.mxu0 0.0
    %556 = vmatpush1.msra.mxu0 0.0
    %557 = vmatprep.subr.mxu0 0.0
    %558 = vmatpush1.msra.mxu0 0.0
    %559 = vmatprep.subr.mxu0 0.0
    %560 = vmatpush1.msra.mxu0 0.0
    %561 = vmatprep.subr.mxu0 0.0
    %562 = vmatpush1.msra.mxu0 0.0
    %563 = vmatprep.subr.mxu0 0.0
    %564 = vmatpush1.msra.mxu0 0.0
    %565 = vmatprep.subr.mxu0 0.0
    %566 = vmatpush1.msra.mxu0 0.0
    %567 = vmatprep.subr.mxu0 0.0
    %568 = vmatpush1.msra.mxu0 0.0
    %569 = vmatprep.subr.mxu0 0.0
    %570 = vmatpush1.msra.mxu0 0.0
    %571 = vmatprep.subr.mxu0 0.0
    %572 = vmatpush1.msra.mxu0 0.0
    %573 = vmatprep.subr.mxu0 0.0
    %574 = vmatpush1.msra.mxu0 0.0
    %575 = vmatprep.subr.mxu0 0.0
    %576 = vmatpush1.msra.mxu0 0.0
    %577 = vmatprep.subr.mxu0 0.0
    %578 = vmatpush1.msra.mxu0 0.0
    %579 = vmatprep.subr.mxu0 0.0
    %580 = vmatpush1.msra.mxu0 0.0
    %581 = vmatprep.subr.mxu0 0.0
    %582 = vmatpush1.msra.mxu0 0.0
    %583 = vmatprep.subr.mxu0 0.0
    %584 = vmatpush1.msra.mxu0 0.0
    %585 = vmatprep.subr.mxu0 0.0
    %586 = vmatpush1.msra.mxu0 0.0
    %587 = vmatprep.subr.mxu0 0.0
    %588 = vmatpush1.msra.mxu0 0.0
    %589 = vmatprep.subr.mxu0 0.0
    %590 = vmatpush1.msra.mxu0 0.0
    %591 = vmatprep.subr.mxu0 0.0
    %592 = vmatpush1.msra.mxu0 0.0
    %593 = vmatprep.subr.mxu0 0.0
    %594 = vmatpush1.msra.mxu0 0.0
    %595 = vmatprep.subr.mxu0 0.0
    %596 = vmatpush1.msra.mxu0 0.0
    %597 = vmatprep.mubr.f32.mxu0 0.0
    %598 = vmatmul.mubr.f32.gmra.mrb[0].mxu0 %v519
    %v599 = vpop.f32.mrb[0].mxu0
    %v600 = vadd.f32 0.0, %v599
    %v601 = vpop.f32.mrb[0].mxu0
    %v602 = vadd.f32 0.0, %v601
    %603 = vdwg.mxu0
    %604 = vmatprep.subr.mxu0 %v531
    %605 = vmatpush1.msra.mxu0 %v528
    %606 = vmatprep.subr.mxu0 0.0
    %607 = vmatpush1.msra.mxu0 0.0
    %608 = vmatprep.subr.mxu0 0.0
    %609 = vmatpush1.msra.mxu0 0.0
    %610 = vmatprep.subr.mxu0 0.0
    %611 = vmatpush1.msra.mxu0 0.0
    %612 = vmatprep.subr.mxu0 0.0
    %613 = vmatpush1.msra.mxu0 0.0
    %614 = vmatprep.subr.mxu0 0.0
    %615 = vmatpush1.msra.mxu0 0.0
    %616 = vmatprep.subr.mxu0 0.0
    %617 = vmatpush1.msra.mxu0 0.0
    %618 = vmatprep.subr.mxu0 0.0
    %619 = vmatpush1.msra.mxu0 0.0
    %620 = vmatprep.subr.mxu0 0.0
    %621 = vmatpush1.msra.mxu0 0.0
    %622 = vmatprep.subr.mxu0 0.0
    %623 = vmatpush1.msra.mxu0 0.0
    %624 = vmatprep.subr.mxu0 0.0
    %625 = vmatpush1.msra.mxu0 0.0
    %626 = vmatprep.subr.mxu0 0.0
    %627 = vmatpush1.msra.mxu0 0.0
    %628 = vmatprep.subr.mxu0 0.0
    %629 = vmatpush1.msra.mxu0 0.0
    %630 = vmatprep.subr.mxu0 0.0
    %631 = vmatpush1.msra.mxu0 0.0
    %632 = vmatprep.subr.mxu0 0.0
    %633 = vmatpush1.msra.mxu0 0.0
    %634 = vmatprep.subr.mxu0 0.0
    %635 = vmatpush1.msra.mxu0 0.0
    %636 = vmatprep.subr.mxu0 0.0
    %637 = vmatpush1.msra.mxu0 0.0
    %638 = vmatprep.subr.mxu0 0.0
    %639 = vmatpush1.msra.mxu0 0.0
    %640 = vmatprep.subr.mxu0 0.0
    %641 = vmatpush1.msra.mxu0 0.0
    %642 = vmatprep.subr.mxu0 0.0
    %643 = vmatpush1.msra.mxu0 0.0
    %644 = vmatprep.subr.mxu0 0.0
    %645 = vmatpush1.msra.mxu0 0.0
    %646 = vmatprep.subr.mxu0 0.0
    %647 = vmatpush1.msra.mxu0 0.0
    %648 = vmatprep.subr.mxu0 0.0
    %649 = vmatpush1.msra.mxu0 0.0
    %650 = vmatprep.subr.mxu0 0.0
    %651 = vmatpush1.msra.mxu0 0.0
    %652 = vmatprep.subr.mxu0 0.0
    %653 = vmatpush1.msra.mxu0 0.0
    %654 = vmatprep.subr.mxu0 0.0
    %655 = vmatpush1.msra.mxu0 0.0
    %656 = vmatprep.subr.mxu0 0.0
    %657 = vmatpush1.msra.mxu0 0.0
    %658 = vmatprep.subr.mxu0 0.0
    %659 = vmatpush1.msra.mxu0 0.0
    %660 = vmatprep.subr.mxu0 0.0
    %661 = vmatpush1.msra.mxu0 0.0
    %662 = vmatprep.subr.mxu0 0.0
    %663 = vmatpush1.msra.mxu0 0.0
    %664 = vmatprep.subr.mxu0 0.0
    %665 = vmatpush1.msra.mxu0 0.0
    %666 = vmatprep.subr.mxu0 0.0
    %667 = vmatpush1.msra.mxu0 0.0
    %668 = vmatprep.mubr.f32.mxu0 0.0
    %669 = vmatmul.mubr.f32.gmra.mrb[0].mxu0 %v519
    %v670 = vpop.f32.mrb[0].mxu0
    %v671 = vadd.f32 0.0, %v670
    %v672 = vpop.f32.mrb[0].mxu0
    %v673 = vadd.f32 0.0, %v672
    %674 = vdwg.mxu0
    %v675 = vadd.f32 %v475, %v600
    %v676 = vadd.f32 %v476, %v602
    %v677 = vadd.f32 %v477, %v671
    %v678 = vadd.f32 %v478, %v673
    %679 = vrot.lane.b32.xlu0 %v69, 1
    %v680 = vpop.permute.xlu0 %679
    %681 = vrot.lane.b32.xlu0 %v73, 1
    %v682 = vpop.permute.xlu0 %681
    %683 = vrot.lane.b32.xlu0 %v70, 1
    %v684 = vpop.permute.xlu0 %683
    %685 = vrot.lane.b32.xlu0 %v74, 1
    %v686 = vpop.permute.xlu0 %685
    %vm687 = vcmp.lt.s32.totalorder %v86, 1
    %v688 = vsel %vm687, %v684, %v686
    %v689 = vsel %vm687, %v682, %v684
    %v690 = vsel %vm687, %v680, %v682
    %v691 = vsel %vm687, %v686, %v680
    %v692 = vsel %vm56, 1, 0
    %v693 = vlaneseq
    %v694 = vshrl.u32 %v693, 7
    %v695 = vsub.s32 0, %v694
    %v696 = vrot.slane %v692, %v695
    %v697 = vlaneseq
    %v698 = vshrl.u32 %v697, 7
    %v699 = vsub.s32 1, %v698
    %v700 = vrot.slane %v692, %v699
    %v701 = vlaneseq
    %v702 = vshrl.u32 %v701, 7
    %v703 = vsub.s32 2, %v702
    %v704 = vrot.slane %v692, %v703
    %v705 = vlaneseq
    %v706 = vshrl.u32 %v705, 7
    %v707 = vsub.s32 3, %v706
    %v708 = vrot.slane %v692, %v707
    %vm709 = vcmp.eq.s32.totalorder %v696, 1
    %vm710 = vcmp.eq.s32.totalorder %v700, 1
    %vm711 = vcmp.eq.s32.totalorder %v704, 1
    %vm712 = vcmp.eq.s32.totalorder %v708, 1
    %v713 = vsel %vm709, %v691, 0.0
    %v714 = vsel %vm710, %v690, 0.0
    %v715 = vsel %vm711, %v689, 0.0
    %v716 = vsel %vm712, %v688, 0.0
    %717 = vrot.lane.b32.xlu0 %v39, 116
    %v718 = vpop.permute.xlu0 %717
    %v719 = vsel %vm117, %v718, 0
    %v722 = vsel %vm120, %v713, 0
    %v725 = vsel %vm120, %v714, 0
    %v728 = vsel %vm120, %v715, 0
    %v731 = vsel %vm120, %v716, 0
    %733 = vmatprep.subr.mxu0 %v725
    %734 = vmatpush1.msra.mxu0 %v722
    %735 = vmatprep.subr.mxu0 0.0
    %736 = vmatpush1.msra.mxu0 0.0
    %737 = vmatprep.subr.mxu0 0.0
    %738 = vmatpush1.msra.mxu0 0.0
    %739 = vmatprep.subr.mxu0 0.0
    %740 = vmatpush1.msra.mxu0 0.0
    %741 = vmatprep.subr.mxu0 0.0
    %742 = vmatpush1.msra.mxu0 0.0
    %743 = vmatprep.subr.mxu0 0.0
    %744 = vmatpush1.msra.mxu0 0.0
    %745 = vmatprep.subr.mxu0 0.0
    %746 = vmatpush1.msra.mxu0 0.0
    %747 = vmatprep.subr.mxu0 0.0
    %748 = vmatpush1.msra.mxu0 0.0
    %749 = vmatprep.subr.mxu0 0.0
    %750 = vmatpush1.msra.mxu0 0.0
    %751 = vmatprep.subr.mxu0 0.0
    %752 = vmatpush1.msra.mxu0 0.0
    %753 = vmatprep.subr.mxu0 0.0
    %754 = vmatpush1.msra.mxu0 0.0
    %755 = vmatprep.subr.mxu0 0.0
    %756 = vmatpush1.msra.mxu0 0.0
    %757 = vmatprep.subr.mxu0 0.0
    %758 = vmatpush1.msra.mxu0 0.0
    %759 = vmatprep.subr.mxu0 0.0
    %760 = vmatpush1.msra.mxu0 0.0
    %761 = vmatprep.subr.mxu0 0.0
    %762 = vmatpush1.msra.mxu0 0.0
    %763 = vmatprep.subr.mxu0 0.0
    %764 = vmatpush1.msra.mxu0 0.0
    %765 = vmatprep.subr.mxu0 0.0
    %766 = vmatpush1.msra.mxu0 0.0
    %767 = vmatprep.subr.mxu0 0.0
    %768 = vmatpush1.msra.mxu0 0.0
    %769 = vmatprep.subr.mxu0 0.0
    %770 = vmatpush1.msra.mxu0 0.0
    %771 = vmatprep.subr.mxu0 0.0
    %772 = vmatpush1.msra.mxu0 0.0
    %773 = vmatprep.subr.mxu0 0.0
    %774 = vmatpush1.msra.mxu0 0.0
    %775 = vmatprep.subr.mxu0 0.0
    %776 = vmatpush1.msra.mxu0 0.0
    %777 = vmatprep.subr.mxu0 0.0
    %778 = vmatpush1.msra.mxu0 0.0
    %779 = vmatprep.subr.mxu0 0.0
    %780 = vmatpush1.msra.mxu0 0.0
    %781 = vmatprep.subr.mxu0 0.0
    %782 = vmatpush1.msra.mxu0 0.0
    %783 = vmatprep.subr.mxu0 0.0
    %784 = vmatpush1.msra.mxu0 0.0
    %785 = vmatprep.subr.mxu0 0.0
    %786 = vmatpush1.msra.mxu0 0.0
    %787 = vmatprep.subr.mxu0 0.0
    %788 = vmatpush1.msra.mxu0 0.0
    %789 = vmatprep.subr.mxu0 0.0
    %790 = vmatpush1.msra.mxu0 0.0
    %791 = vmatprep.subr.mxu0 0.0
    %792 = vmatpush1.msra.mxu0 0.0
    %793 = vmatprep.subr.mxu0 0.0
    %794 = vmatpush1.msra.mxu0 0.0
    %795 = vmatprep.subr.mxu0 0.0
    %796 = vmatpush1.msra.mxu0 0.0
    %797 = vmatprep.mubr.f32.mxu0 0.0
    %798 = vmatmul.mubr.f32.gmra.mrb[0].mxu0 %v719
    %v799 = vpop.f32.mrb[0].mxu0
    %v800 = vadd.f32 0.0, %v799
    %v801 = vpop.f32.mrb[0].mxu0
    %v802 = vadd.f32 0.0, %v801
    %803 = vdwg.mxu0
    %804 = vmatprep.subr.mxu0 %v731
    %805 = vmatpush1.msra.mxu0 %v728
    %806 = vmatprep.subr.mxu0 0.0
    %807 = vmatpush1.msra.mxu0 0.0
    %808 = vmatprep.subr.mxu0 0.0
    %809 = vmatpush1.msra.mxu0 0.0
    %810 = vmatprep.subr.mxu0 0.0
    %811 = vmatpush1.msra.mxu0 0.0
    %812 = vmatprep.subr.mxu0 0.0
    %813 = vmatpush1.msra.mxu0 0.0
    %814 = vmatprep.subr.mxu0 0.0
    %815 = vmatpush1.msra.mxu0 0.0
    %816 = vmatprep.subr.mxu0 0.0
    %817 = vmatpush1.msra.mxu0 0.0
    %818 = vmatprep.subr.mxu0 0.0
    %819 = vmatpush1.msra.mxu0 0.0
    %820 = vmatprep.subr.mxu0 0.0
    %821 = vmatpush1.msra.mxu0 0.0
    %822 = vmatprep.subr.mxu0 0.0
    %823 = vmatpush1.msra.mxu0 0.0
    %824 = vmatprep.subr.mxu0 0.0
    %825 = vmatpush1.msra.mxu0 0.0
    %826 = vmatprep.subr.mxu0 0.0
    %827 = vmatpush1.msra.mxu0 0.0
    %828 = vmatprep.subr.mxu0 0.0
    %829 = vmatpush1.msra.mxu0 0.0
    %830 = vmatprep.subr.mxu0 0.0
    %831 = vmatpush1.msra.mxu0 0.0
    %832 = vmatprep.subr.mxu0 0.0
    %833 = vmatpush1.msra.mxu0 0.0
    %834 = vmatprep.subr.mxu0 0.0
    %835 = vmatpush1.msra.mxu0 0.0
    %836 = vmatprep.subr.mxu0 0.0
    %837 = vmatpush1.msra.mxu0 0.0
    %838 = vmatprep.subr.mxu0 0.0
    %839 = vmatpush1.msra.mxu0 0.0
    %840 = vmatprep.subr.mxu0 0.0
    %841 = vmatpush1.msra.mxu0 0.0
    %842 = vmatprep.subr.mxu0 0.0
    %843 = vmatpush1.msra.mxu0 0.0
    %844 = vmatprep.subr.mxu0 0.0
    %845 = vmatpush1.msra.mxu0 0.0
    %846 = vmatprep.subr.mxu0 0.0
    %847 = vmatpush1.msra.mxu0 0.0
    %848 = vmatprep.subr.mxu0 0.0
    %849 = vmatpush1.msra.mxu0 0.0
    %850 = vmatprep.subr.mxu0 0.0
    %851 = vmatpush1.msra.mxu0 0.0
    %852 = vmatprep.subr.mxu0 0.0
    %853 = vmatpush1.msra.mxu0 0.0
    %854 = vmatprep.subr.mxu0 0.0
    %855 = vmatpush1.msra.mxu0 0.0
    %856 = vmatprep.subr.mxu0 0.0
    %857 = vmatpush1.msra.mxu0 0.0
    %858 = vmatprep.subr.mxu0 0.0
    %859 = vmatpush1.msra.mxu0 0.0
    %860 = vmatprep.subr.mxu0 0.0
    %861 = vmatpush1.msra.mxu0 0.0
    %862 = vmatprep.subr.mxu0 0.0
    %863 = vmatpush1.msra.mxu0 0.0
    %864 = vmatprep.subr.mxu0 0.0
    %865 = vmatpush1.msra.mxu0 0.0
    %866 = vmatprep.subr.mxu0 0.0
    %867 = vmatpush1.msra.mxu0 0.0
    %868 = vmatprep.mubr.f32.mxu0 0.0
    %869 = vmatmul.mubr.f32.gmra.mrb[0].mxu0 %v719
    %v870 = vpop.f32.mrb[0].mxu0
    %v871 = vadd.f32 0.0, %v870
    %v872 = vpop.f32.mrb[0].mxu0
    %v873 = vadd.f32 0.0, %v872
    %874 = vdwg.mxu0
    %v875 = vadd.f32 %v675, %v800
    %v876 = vadd.f32 %v676, %v802
    %v877 = vadd.f32 %v677, %v871
    %v878 = vadd.f32 %v678, %v873
    %879 = vrot.lane.b32.xlu0 %v39, 112
    %v880 = vpop.permute.xlu0 %879
    %v881 = vsel %vm117, %v880, 0
    %v883 = vsel %vm120, %v69, 0
    %v885 = vsel %vm120, %v73, 0
    %v887 = vsel %vm120, %v70, 0
    %v889 = vsel %vm120, %v74, 0
    %891 = vmatprep.subr.mxu0 %v885
    %892 = vmatpush1.msra.mxu0 %v883
    %893 = vmatprep.subr.mxu0 0.0
    %894 = vmatpush1.msra.mxu0 0.0
    %895 = vmatprep.subr.mxu0 0.0
    %896 = vmatpush1.msra.mxu0 0.0
    %897 = vmatprep.subr.mxu0 0.0
    %898 = vmatpush1.msra.mxu0 0.0
    %899 = vmatprep.subr.mxu0 0.0
    %900 = vmatpush1.msra.mxu0 0.0
    %901 = vmatprep.subr.mxu0 0.0
    %902 = vmatpush1.msra.mxu0 0.0
    %903 = vmatprep.subr.mxu0 0.0
    %904 = vmatpush1.msra.mxu0 0.0
    %905 = vmatprep.subr.mxu0 0.0
    %906 = vmatpush1.msra.mxu0 0.0
    %907 = vmatprep.subr.mxu0 0.0
    %908 = vmatpush1.msra.mxu0 0.0
    %909 = vmatprep.subr.mxu0 0.0
    %910 = vmatpush1.msra.mxu0 0.0
    %911 = vmatprep.subr.mxu0 0.0
    %912 = vmatpush1.msra.mxu0 0.0
    %913 = vmatprep.subr.mxu0 0.0
    %914 = vmatpush1.msra.mxu0 0.0
    %915 = vmatprep.subr.mxu0 0.0
    %916 = vmatpush1.msra.mxu0 0.0
    %917 = vmatprep.subr.mxu0 0.0
    %918 = vmatpush1.msra.mxu0 0.0
    %919 = vmatprep.subr.mxu0 0.0
    %920 = vmatpush1.msra.mxu0 0.0
    %921 = vmatprep.subr.mxu0 0.0
    %922 = vmatpush1.msra.mxu0 0.0
    %923 = vmatprep.subr.mxu0 0.0
    %924 = vmatpush1.msra.mxu0 0.0
    %925 = vmatprep.subr.mxu0 0.0
    %926 = vmatpush1.msra.mxu0 0.0
    %927 = vmatprep.subr.mxu0 0.0
    %928 = vmatpush1.msra.mxu0 0.0
    %929 = vmatprep.subr.mxu0 0.0
    %930 = vmatpush1.msra.mxu0 0.0
    %931 = vmatprep.subr.mxu0 0.0
    %932 = vmatpush1.msra.mxu0 0.0
    %933 = vmatprep.subr.mxu0 0.0
    %934 = vmatpush1.msra.mxu0 0.0
    %935 = vmatprep.subr.mxu0 0.0
    %936 = vmatpush1.msra.mxu0 0.0
    %937 = vmatprep.subr.mxu0 0.0
    %938 = vmatpush1.msra.mxu0 0.0
    %939 = vmatprep.subr.mxu0 0.0
    %940 = vmatpush1.msra.mxu0 0.0
    %941 = vmatprep.subr.mxu0 0.0
    %942 = vmatpush1.msra.mxu0 0.0
    %943 = vmatprep.subr.mxu0 0.0
    %944 = vmatpush1.msra.mxu0 0.0
    %945 = vmatprep.subr.mxu0 0.0
    %946 = vmatpush1.msra.mxu0 0.0
    %947 = vmatprep.subr.mxu0 0.0
    %948 = vmatpush1.msra.mxu0 0.0
    %949 = vmatprep.subr.mxu0 0.0
    %950 = vmatpush1.msra.mxu0 0.0
    %951 = vmatprep.subr.mxu0 0.0
    %952 = vmatpush1.msra.mxu0 0.0
    %953 = vmatprep.subr.mxu0 0.0
    %954 = vmatpush1.msra.mxu0 0.0
    %955 = vmatprep.mubr.f32.mxu0 0.0
    %956 = vmatmul.mubr.f32.gmra.mrb[0].mxu0 %v881
    %v957 = vpop.f32.mrb[0].mxu0
    %v958 = vadd.f32 0.0, %v957
    %v959 = vpop.f32.mrb[0].mxu0
    %v960 = vadd.f32 0.0, %v959
    %961 = vdwg.mxu0
    %962 = vmatprep.subr.mxu0 %v889
    %963 = vmatpush1.msra.mxu0 %v887
    %964 = vmatprep.subr.mxu0 0.0
    %965 = vmatpush1.msra.mxu0 0.0
    %966 = vmatprep.subr.mxu0 0.0
    %967 = vmatpush1.msra.mxu0 0.0
    %968 = vmatprep.subr.mxu0 0.0
    %969 = vmatpush1.msra.mxu0 0.0
    %970 = vmatprep.subr.mxu0 0.0
    %971 = vmatpush1.msra.mxu0 0.0
    %972 = vmatprep.subr.mxu0 0.0
    %973 = vmatpush1.msra.mxu0 0.0
    %974 = vmatprep.subr.mxu0 0.0
    %975 = vmatpush1.msra.mxu0 0.0
    %976 = vmatprep.subr.mxu0 0.0
    %977 = vmatpush1.msra.mxu0 0.0
    %978 = vmatprep.subr.mxu0 0.0
    %979 = vmatpush1.msra.mxu0 0.0
    %980 = vmatprep.subr.mxu0 0.0
    %981 = vmatpush1.msra.mxu0 0.0
    %982 = vmatprep.subr.mxu0 0.0
    %983 = vmatpush1.msra.mxu0 0.0
    %984 = vmatprep.subr.mxu0 0.0
    %985 = vmatpush1.msra.mxu0 0.0
    %986 = vmatprep.subr.mxu0 0.0
    %987 = vmatpush1.msra.mxu0 0.0
    %988 = vmatprep.subr.mxu0 0.0
    %989 = vmatpush1.msra.mxu0 0.0
    %990 = vmatprep.subr.mxu0 0.0
    %991 = vmatpush1.msra.mxu0 0.0
    %992 = vmatprep.subr.mxu0 0.0
    %993 = vmatpush1.msra.mxu0 0.0
    %994 = vmatprep.subr.mxu0 0.0
    %995 = vmatpush1.msra.mxu0 0.0
    %996 = vmatprep.subr.mxu0 0.0
    %997 = vmatpush1.msra.mxu0 0.0
    %998 = vmatprep.subr.mxu0 0.0
    %999 = vmatpush1.msra.mxu0 0.0
    %1000 = vmatprep.subr.mxu0 0.0
    %1001 = vmatpush1.msra.mxu0 0.0
    %1002 = vmatprep.subr.mxu0 0.0
    %1003 = vmatpush1.msra.mxu0 0.0
    %1004 = vmatprep.subr.mxu0 0.0
    %1005 = vmatpush1.msra.mxu0 0.0
    %1006 = vmatprep.subr.mxu0 0.0
    %1007 = vmatpush1.msra.mxu0 0.0
    %1008 = vmatprep.subr.mxu0 0.0
    %1009 = vmatpush1.msra.mxu0 0.0
    %1010 = vmatprep.subr.mxu0 0.0
    %1011 = vmatpush1.msra.mxu0 0.0
    %1012 = vmatprep.subr.mxu0 0.0
    %1013 = vmatpush1.msra.mxu0 0.0
    %1014 = vmatprep.subr.mxu0 0.0
    %1015 = vmatpush1.msra.mxu0 0.0
    %1016 = vmatprep.subr.mxu0 0.0
    %1017 = vmatpush1.msra.mxu0 0.0
    %1018 = vmatprep.subr.mxu0 0.0
    %1019 = vmatpush1.msra.mxu0 0.0
    %1020 = vmatprep.subr.mxu0 0.0
    %1021 = vmatpush1.msra.mxu0 0.0
    %1022 = vmatprep.subr.mxu0 0.0
    %1023 = vmatpush1.msra.mxu0 0.0
    %1024 = vmatprep.subr.mxu0 0.0
    %1025 = vmatpush1.msra.mxu0 0.0
    %1026 = vmatprep.mubr.f32.mxu0 0.0
    %1027 = vmatmul.mubr.f32.gmra.mrb[0].mxu0 %v881
    %v1028 = vpop.f32.mrb[0].mxu0
    %v1029 = vadd.f32 0.0, %v1028
    %v1030 = vpop.f32.mrb[0].mxu0
    %v1031 = vadd.f32 0.0, %v1030
    %1032 = vdwg.mxu0
    %v1033 = vadd.f32 %v875, %v958
    %v1034 = vadd.f32 %v876, %v960
    %v1035 = vadd.f32 %v877, %v1029
    %v1036 = vadd.f32 %v878, %v1031
    %1037 = vrot.lane.b32.xlu0 %v69, 127
    %v1038 = vpop.permute.xlu0 %1037
    %1039 = vrot.lane.b32.xlu0 %v73, 127
    %v1040 = vpop.permute.xlu0 %1039
    %1041 = vrot.lane.b32.xlu0 %v70, 127
    %v1042 = vpop.permute.xlu0 %1041
    %1043 = vrot.lane.b32.xlu0 %v74, 127
    %v1044 = vpop.permute.xlu0 %1043
    %vm1045 = vcmp.lt.s32.totalorder %v86, 127
    %v1046 = vsel %vm1045, %v1042, %v1044
    %v1047 = vsel %vm1045, %v1040, %v1042
    %v1048 = vsel %vm1045, %v1038, %v1040
    %v1049 = vsel %vm1045, %v1044, %v1038
    %v1050 = vsel %vm59, 1, 0
    %v1051 = vlaneseq
    %v1052 = vshrl.u32 %v1051, 7
    %v1053 = vsub.s32 0, %v1052
    %v1054 = vrot.slane %v1050, %v1053
    %v1055 = vlaneseq
    %v1056 = vshrl.u32 %v1055, 7
    %v1057 = vsub.s32 1, %v1056
    %v1058 = vrot.slane %v1050, %v1057
    %v1059 = vlaneseq
    %v1060 = vshrl.u32 %v1059, 7
    %v1061 = vsub.s32 2, %v1060
    %v1062 = vrot.slane %v1050, %v1061
    %v1063 = vlaneseq
    %v1064 = vshrl.u32 %v1063, 7
    %v1065 = vsub.s32 3, %v1064
    %v1066 = vrot.slane %v1050, %v1065
    %vm1067 = vcmp.eq.s32.totalorder %v1054, 1
    %vm1068 = vcmp.eq.s32.totalorder %v1058, 1
    %vm1069 = vcmp.eq.s32.totalorder %v1062, 1
    %vm1070 = vcmp.eq.s32.totalorder %v1066, 1
    %v1071 = vsel %vm1067, %v1048, 0.0
    %v1072 = vsel %vm1068, %v1047, 0.0
    %v1073 = vsel %vm1069, %v1046, 0.0
    %v1074 = vsel %vm1070, %v1049, 0.0
    %1075 = vrot.lane.b32.xlu0 %v39, 108
    %v1076 = vpop.permute.xlu0 %1075
    %v1077 = vsel %vm117, %v1076, 0
    %v1080 = vsel %vm120, %v1071, 0
    %v1083 = vsel %vm120, %v1072, 0
    %v1086 = vsel %vm120, %v1073, 0
    %v1089 = vsel %vm120, %v1074, 0
    %1091 = vmatprep.subr.mxu0 %v1083
    %1092 = vmatpush1.msra.mxu0 %v1080
    %1093 = vmatprep.subr.mxu0 0.0
    %1094 = vmatpush1.msra.mxu0 0.0
    %1095 = vmatprep.subr.mxu0 0.0
    %1096 = vmatpush1.msra.mxu0 0.0
    %1097 = vmatprep.subr.mxu0 0.0
    %1098 = vmatpush1.msra.mxu0 0.0
    %1099 = vmatprep.subr.mxu0 0.0
    %1100 = vmatpush1.msra.mxu0 0.0
    %1101 = vmatprep.subr.mxu0 0.0
    %1102 = vmatpush1.msra.mxu0 0.0
    %1103 = vmatprep.subr.mxu0 0.0
    %1104 = vmatpush1.msra.mxu0 0.0
    %1105 = vmatprep.subr.mxu0 0.0
    %1106 = vmatpush1.msra.mxu0 0.0
    %1107 = vmatprep.subr.mxu0 0.0
    %1108 = vmatpush1.msra.mxu0 0.0
    %1109 = vmatprep.subr.mxu0 0.0
    %1110 = vmatpush1.msra.mxu0 0.0
    %1111 = vmatprep.subr.mxu0 0.0
    %1112 = vmatpush1.msra.mxu0 0.0
    %1113 = vmatprep.subr.mxu0 0.0
    %1114 = vmatpush1.msra.mxu0 0.0
    %1115 = vmatprep.subr.mxu0 0.0
    %1116 = vmatpush1.msra.mxu0 0.0
    %1117 = vmatprep.subr.mxu0 0.0
    %1118 = vmatpush1.msra.mxu0 0.0
    %1119 = vmatprep.subr.mxu0 0.0
    %1120 = vmatpush1.msra.mxu0 0.0
    %1121 = vmatprep.subr.mxu0 0.0
    %1122 = vmatpush1.msra.mxu0 0.0
    %1123 = vmatprep.subr.mxu0 0.0
    %1124 = vmatpush1.msra.mxu0 0.0
    %1125 = vmatprep.subr.mxu0 0.0
    %1126 = vmatpush1.msra.mxu0 0.0
    %1127 = vmatprep.subr.mxu0 0.0
    %1128 = vmatpush1.msra.mxu0 0.0
    %1129 = vmatprep.subr.mxu0 0.0
    %1130 = vmatpush1.msra.mxu0 0.0
    %1131 = vmatprep.subr.mxu0 0.0
    %1132 = vmatpush1.msra.mxu0 0.0
    %1133 = vmatprep.subr.mxu0 0.0
    %1134 = vmatpush1.msra.mxu0 0.0
    %1135 = vmatprep.subr.mxu0 0.0
    %1136 = vmatpush1.msra.mxu0 0.0
    %1137 = vmatprep.subr.mxu0 0.0
    %1138 = vmatpush1.msra.mxu0 0.0
    %1139 = vmatprep.subr.mxu0 0.0
    %1140 = vmatpush1.msra.mxu0 0.0
    %1141 = vmatprep.subr.mxu0 0.0
    %1142 = vmatpush1.msra.mxu0 0.0
    %1143 = vmatprep.subr.mxu0 0.0
    %1144 = vmatpush1.msra.mxu0 0.0
    %1145 = vmatprep.subr.mxu0 0.0
    %1146 = vmatpush1.msra.mxu0 0.0
    %1147 = vmatprep.subr.mxu0 0.0
    %1148 = vmatpush1.msra.mxu0 0.0
    %1149 = vmatprep.subr.mxu0 0.0
    %1150 = vmatpush1.msra.mxu0 0.0
    %1151 = vmatprep.subr.mxu0 0.0
    %1152 = vmatpush1.msra.mxu0 0.0
    %1153 = vmatprep.subr.mxu0 0.0
    %1154 = vmatpush1.msra.mxu0 0.0
    %1155 = vmatprep.mubr.f32.mxu0 0.0
    %1156 = vmatmul.mubr.f32.gmra.mrb[0].mxu0 %v1077
    %v1157 = vpop.f32.mrb[0].mxu0
    %v1158 = vadd.f32 0.0, %v1157
    %v1159 = vpop.f32.mrb[0].mxu0
    %v1160 = vadd.f32 0.0, %v1159
    %1161 = vdwg.mxu0
    %1162 = vmatprep.subr.mxu0 %v1089
    %1163 = vmatpush1.msra.mxu0 %v1086
    %1164 = vmatprep.subr.mxu0 0.0
    %1165 = vmatpush1.msra.mxu0 0.0
    %1166 = vmatprep.subr.mxu0 0.0
    %1167 = vmatpush1.msra.mxu0 0.0
    %1168 = vmatprep.subr.mxu0 0.0
    %1169 = vmatpush1.msra.mxu0 0.0
    %1170 = vmatprep.subr.mxu0 0.0
    %1171 = vmatpush1.msra.mxu0 0.0
    %1172 = vmatprep.subr.mxu0 0.0
    %1173 = vmatpush1.msra.mxu0 0.0
    %1174 = vmatprep.subr.mxu0 0.0
    %1175 = vmatpush1.msra.mxu0 0.0
    %1176 = vmatprep.subr.mxu0 0.0
    %1177 = vmatpush1.msra.mxu0 0.0
    %1178 = vmatprep.subr.mxu0 0.0
    %1179 = vmatpush1.msra.mxu0 0.0
    %1180 = vmatprep.subr.mxu0 0.0
    %1181 = vmatpush1.msra.mxu0 0.0
    %1182 = vmatprep.subr.mxu0 0.0
    %1183 = vmatpush1.msra.mxu0 0.0
    %1184 = vmatprep.subr.mxu0 0.0
    %1185 = vmatpush1.msra.mxu0 0.0
    %1186 = vmatprep.subr.mxu0 0.0
    %1187 = vmatpush1.msra.mxu0 0.0
    %1188 = vmatprep.subr.mxu0 0.0
    %1189 = vmatpush1.msra.mxu0 0.0
    %1190 = vmatprep.subr.mxu0 0.0
    %1191 = vmatpush1.msra.mxu0 0.0
    %1192 = vmatprep.subr.mxu0 0.0
    %1193 = vmatpush1.msra.mxu0 0.0
    %1194 = vmatprep.subr.mxu0 0.0
    %1195 = vmatpush1.msra.mxu0 0.0
    %1196 = vmatprep.subr.mxu0 0.0
    %1197 = vmatpush1.msra.mxu0 0.0
    %1198 = vmatprep.subr.mxu0 0.0
    %1199 = vmatpush1.msra.mxu0 0.0
    %1200 = vmatprep.subr.mxu0 0.0
    %1201 = vmatpush1.msra.mxu0 0.0
    %1202 = vmatprep.subr.mxu0 0.0
    %1203 = vmatpush1.msra.mxu0 0.0
    %1204 = vmatprep.subr.mxu0 0.0
    %1205 = vmatpush1.msra.mxu0 0.0
    %1206 = vmatprep.subr.mxu0 0.0
    %1207 = vmatpush1.msra.mxu0 0.0
    %1208 = vmatprep.subr.mxu0 0.0
    %1209 = vmatpush1.msra.mxu0 0.0
    %1210 = vmatprep.subr.mxu0 0.0
    %1211 = vmatpush1.msra.mxu0 0.0
    %1212 = vmatprep.subr.mxu0 0.0
    %1213 = vmatpush1.msra.mxu0 0.0
    %1214 = vmatprep.subr.mxu0 0.0
    %1215 = vmatpush1.msra.mxu0 0.0
    %1216 = vmatprep.subr.mxu0 0.0
    %1217 = vmatpush1.msra.mxu0 0.0
    %1218 = vmatprep.subr.mxu0 0.0
    %1219 = vmatpush1.msra.mxu0 0.0
    %1220 = vmatprep.subr.mxu0 0.0
    %1221 = vmatpush1.msra.mxu0 0.0
    %1222 = vmatprep.subr.mxu0 0.0
    %1223 = vmatpush1.msra.mxu0 0.0
    %1224 = vmatprep.subr.mxu0 0.0
    %1225 = vmatpush1.msra.mxu0 0.0
    %1226 = vmatprep.mubr.f32.mxu0 0.0
    %1227 = vmatmul.mubr.f32.gmra.mrb[0].mxu0 %v1077
    %v1228 = vpop.f32.mrb[0].mxu0
    %v1229 = vadd.f32 0.0, %v1228
    %v1230 = vpop.f32.mrb[0].mxu0
    %v1231 = vadd.f32 0.0, %v1230
    %1232 = vdwg.mxu0
    %v1233 = vadd.f32 %v1033, %v1158
    %v1234 = vadd.f32 %v1034, %v1160
    %v1235 = vadd.f32 %v1035, %v1229
    %v1236 = vadd.f32 %v1036, %v1231
    %1237 = vrot.lane.b32.xlu0 %v69, 113
    %v1238 = vpop.permute.xlu0 %1237
    %1239 = vrot.lane.b32.xlu0 %v73, 113
    %v1240 = vpop.permute.xlu0 %1239
    %1241 = vrot.lane.b32.xlu0 %v70, 113
    %v1242 = vpop.permute.xlu0 %1241
    %1243 = vrot.lane.b32.xlu0 %v74, 113
    %v1244 = vpop.permute.xlu0 %1243
    %vm1245 = vcmp.lt.s32.totalorder %v86, 113
    %v1246 = vsel %vm1245, %v1242, %v1244
    %v1247 = vsel %vm1245, %v1240, %v1242
    %v1248 = vsel %vm1245, %v1238, %v1240
    %v1249 = vsel %vm1245, %v1244, %v1238
    %v1250 = vsel %vm62, 1, 0
    %v1251 = vlaneseq
    %v1252 = vshrl.u32 %v1251, 7
    %v1253 = vsub.s32 0, %v1252
    %v1254 = vrot.slane %v1250, %v1253
    %v1255 = vlaneseq
    %v1256 = vshrl.u32 %v1255, 7
    %v1257 = vsub.s32 1, %v1256
    %v1258 = vrot.slane %v1250, %v1257
    %v1259 = vlaneseq
    %v1260 = vshrl.u32 %v1259, 7
    %v1261 = vsub.s32 2, %v1260
    %v1262 = vrot.slane %v1250, %v1261
    %v1263 = vlaneseq
    %v1264 = vshrl.u32 %v1263, 7
    %v1265 = vsub.s32 3, %v1264
    %v1266 = vrot.slane %v1250, %v1265
    %vm1267 = vcmp.eq.s32.totalorder %v1254, 1
    %vm1268 = vcmp.eq.s32.totalorder %v1258, 1
    %vm1269 = vcmp.eq.s32.totalorder %v1262, 1
    %vm1270 = vcmp.eq.s32.totalorder %v1266, 1
    %v1271 = vsel %vm1267, %v1248, 0.0
    %v1272 = vsel %vm1268, %v1247, 0.0
    %v1273 = vsel %vm1269, %v1246, 0.0
    %v1274 = vsel %vm1270, %v1249, 0.0
    %1275 = vrot.lane.b32.xlu0 %v39, 104
    %v1276 = vpop.permute.xlu0 %1275
    %v1277 = vsel %vm117, %v1276, 0
    %v1280 = vsel %vm120, %v1271, 0
    %v1283 = vsel %vm120, %v1272, 0
    %v1286 = vsel %vm120, %v1273, 0
    %v1289 = vsel %vm120, %v1274, 0
    %1291 = vmatprep.subr.mxu0 %v1283
    %1292 = vmatpush1.msra.mxu0 %v1280
    %1293 = vmatprep.subr.mxu0 0.0
    %1294 = vmatpush1.msra.mxu0 0.0
    %1295 = vmatprep.subr.mxu0 0.0
    %1296 = vmatpush1.msra.mxu0 0.0
    %1297 = vmatprep.subr.mxu0 0.0
    %1298 = vmatpush1.msra.mxu0 0.0
    %1299 = vmatprep.subr.mxu0 0.0
    %1300 = vmatpush1.msra.mxu0 0.0
    %1301 = vmatprep.subr.mxu0 0.0
    %1302 = vmatpush1.msra.mxu0 0.0
    %1303 = vmatprep.subr.mxu0 0.0
    %1304 = vmatpush1.msra.mxu0 0.0
    %1305 = vmatprep.subr.mxu0 0.0
    %1306 = vmatpush1.msra.mxu0 0.0
    %1307 = vmatprep.subr.mxu0 0.0
    %1308 = vmatpush1.msra.mxu0 0.0
    %1309 = vmatprep.subr.mxu0 0.0
    %1310 = vmatpush1.msra.mxu0 0.0
    %1311 = vmatprep.subr.mxu0 0.0
    %1312 = vmatpush1.msra.mxu0 0.0
    %1313 = vmatprep.subr.mxu0 0.0
    %1314 = vmatpush1.msra.mxu0 0.0
    %1315 = vmatprep.subr.mxu0 0.0
    %1316 = vmatpush1.msra.mxu0 0.0
    %1317 = vmatprep.subr.mxu0 0.0
    %1318 = vmatpush1.msra.mxu0 0.0
    %1319 = vmatprep.subr.mxu0 0.0
    %1320 = vmatpush1.msra.mxu0 0.0
    %1321 = vmatprep.subr.mxu0 0.0
    %1322 = vmatpush1.msra.mxu0 0.0
    %1323 = vmatprep.subr.mxu0 0.0
    %1324 = vmatpush1.msra.mxu0 0.0
    %1325 = vmatprep.subr.mxu0 0.0
    %1326 = vmatpush1.msra.mxu0 0.0
    %1327 = vmatprep.subr.mxu0 0.0
    %1328 = vmatpush1.msra.mxu0 0.0
    %1329 = vmatprep.subr.mxu0 0.0
    %1330 = vmatpush1.msra.mxu0 0.0
    %1331 = vmatprep.subr.mxu0 0.0
    %1332 = vmatpush1.msra.mxu0 0.0
    %1333 = vmatprep.subr.mxu0 0.0
    %1334 = vmatpush1.msra.mxu0 0.0
    %1335 = vmatprep.subr.mxu0 0.0
    %1336 = vmatpush1.msra.mxu0 0.0
    %1337 = vmatprep.subr.mxu0 0.0
    %1338 = vmatpush1.msra.mxu0 0.0
    %1339 = vmatprep.subr.mxu0 0.0
    %1340 = vmatpush1.msra.mxu0 0.0
    %1341 = vmatprep.subr.mxu0 0.0
    %1342 = vmatpush1.msra.mxu0 0.0
    %1343 = vmatprep.subr.mxu0 0.0
    %1344 = vmatpush1.msra.mxu0 0.0
    %1345 = vmatprep.subr.mxu0 0.0
    %1346 = vmatpush1.msra.mxu0 0.0
    %1347 = vmatprep.subr.mxu0 0.0
    %1348 = vmatpush1.msra.mxu0 0.0
    %1349 = vmatprep.subr.mxu0 0.0
    %1350 = vmatpush1.msra.mxu0 0.0
    %1351 = vmatprep.subr.mxu0 0.0
    %1352 = vmatpush1.msra.mxu0 0.0
    %1353 = vmatprep.subr.mxu0 0.0
    %1354 = vmatpush1.msra.mxu0 0.0
    %1355 = vmatprep.mubr.f32.mxu0 0.0
    %1356 = vmatmul.mubr.f32.gmra.mrb[0].mxu0 %v1277
    %v1357 = vpop.f32.mrb[0].mxu0
    %v1358 = vadd.f32 0.0, %v1357
    %v1359 = vpop.f32.mrb[0].mxu0
    %v1360 = vadd.f32 0.0, %v1359
    %1361 = vdwg.mxu0
    %1362 = vmatprep.subr.mxu0 %v1289
    %1363 = vmatpush1.msra.mxu0 %v1286
    %1364 = vmatprep.subr.mxu0 0.0
    %1365 = vmatpush1.msra.mxu0 0.0
    %1366 = vmatprep.subr.mxu0 0.0
    %1367 = vmatpush1.msra.mxu0 0.0
    %1368 = vmatprep.subr.mxu0 0.0
    %1369 = vmatpush1.msra.mxu0 0.0
    %1370 = vmatprep.subr.mxu0 0.0
    %1371 = vmatpush1.msra.mxu0 0.0
    %1372 = vmatprep.subr.mxu0 0.0
    %1373 = vmatpush1.msra.mxu0 0.0
    %1374 = vmatprep.subr.mxu0 0.0
    %1375 = vmatpush1.msra.mxu0 0.0
    %1376 = vmatprep.subr.mxu0 0.0
    %1377 = vmatpush1.msra.mxu0 0.0
    %1378 = vmatprep.subr.mxu0 0.0
    %1379 = vmatpush1.msra.mxu0 0.0
    %1380 = vmatprep.subr.mxu0 0.0
    %1381 = vmatpush1.msra.mxu0 0.0
    %1382 = vmatprep.subr.mxu0 0.0
    %1383 = vmatpush1.msra.mxu0 0.0
    %1384 = vmatprep.subr.mxu0 0.0
    %1385 = vmatpush1.msra.mxu0 0.0
    %1386 = vmatprep.subr.mxu0 0.0
    %1387 = vmatpush1.msra.mxu0 0.0
    %1388 = vmatprep.subr.mxu0 0.0
    %1389 = vmatpush1.msra.mxu0 0.0
    %1390 = vmatprep.subr.mxu0 0.0
    %1391 = vmatpush1.msra.mxu0 0.0
    %1392 = vmatprep.subr.mxu0 0.0
    %1393 = vmatpush1.msra.mxu0 0.0
    %1394 = vmatprep.subr.mxu0 0.0
    %1395 = vmatpush1.msra.mxu0 0.0
    %1396 = vmatprep.subr.mxu0 0.0
    %1397 = vmatpush1.msra.mxu0 0.0
    %1398 = vmatprep.subr.mxu0 0.0
    %1399 = vmatpush1.msra.mxu0 0.0
    %1400 = vmatprep.subr.mxu0 0.0
    %1401 = vmatpush1.msra.mxu0 0.0
    %1402 = vmatprep.subr.mxu0 0.0
    %1403 = vmatpush1.msra.mxu0 0.0
    %1404 = vmatprep.subr.mxu0 0.0
    %1405 = vmatpush1.msra.mxu0 0.0
    %1406 = vmatprep.subr.mxu0 0.0
    %1407 = vmatpush1.msra.mxu0 0.0
    %1408 = vmatprep.subr.mxu0 0.0
    %1409 = vmatpush1.msra.mxu0 0.0
    %1410 = vmatprep.subr.mxu0 0.0
    %1411 = vmatpush1.msra.mxu0 0.0
    %1412 = vmatprep.subr.mxu0 0.0
    %1413 = vmatpush1.msra.mxu0 0.0
    %1414 = vmatprep.subr.mxu0 0.0
    %1415 = vmatpush1.msra.mxu0 0.0
    %1416 = vmatprep.subr.mxu0 0.0
    %1417 = vmatpush1.msra.mxu0 0.0
    %1418 = vmatprep.subr.mxu0 0.0
    %1419 = vmatpush1.msra.mxu0 0.0
    %1420 = vmatprep.subr.mxu0 0.0
    %1421 = vmatpush1.msra.mxu0 0.0
    %1422 = vmatprep.subr.mxu0 0.0
    %1423 = vmatpush1.msra.mxu0 0.0
    %1424 = vmatprep.subr.mxu0 0.0
    %1425 = vmatpush1.msra.mxu0 0.0
    %1426 = vmatprep.mubr.f32.mxu0 0.0
    %1427 = vmatmul.mubr.f32.gmra.mrb[0].mxu0 %v1277
    %v1428 = vpop.f32.mrb[0].mxu0
    %v1429 = vadd.f32 0.0, %v1428
    %v1430 = vpop.f32.mrb[0].mxu0
    %v1431 = vadd.f32 0.0, %v1430
    %1432 = vdwg.mxu0
    %v1433 = vadd.f32 %v1233, %v1358
    %v1434 = vadd.f32 %v1234, %v1360
    %v1435 = vadd.f32 %v1235, %v1429
    %v1436 = vadd.f32 %v1236, %v1431
    %1437 = vrot.lane.b32.xlu0 %v69, 112
    %v1438 = vpop.permute.xlu0 %1437
    %1439 = vrot.lane.b32.xlu0 %v73, 112
    %v1440 = vpop.permute.xlu0 %1439
    %1441 = vrot.lane.b32.xlu0 %v70, 112
    %v1442 = vpop.permute.xlu0 %1441
    %1443 = vrot.lane.b32.xlu0 %v74, 112
    %v1444 = vpop.permute.xlu0 %1443
    %vm1445 = vcmp.lt.s32.totalorder %v86, 112
    %v1446 = vsel %vm1445, %v1442, %v1444
    %v1447 = vsel %vm1445, %v1440, %v1442
    %v1448 = vsel %vm1445, %v1438, %v1440
    %v1449 = vsel %vm1445, %v1444, %v1438
    %v1450 = vsel %vm65, 1, 0
    %v1451 = vlaneseq
    %v1452 = vshrl.u32 %v1451, 7
    %v1453 = vsub.s32 0, %v1452
    %v1454 = vrot.slane %v1450, %v1453
    %v1455 = vlaneseq
    %v1456 = vshrl.u32 %v1455, 7
    %v1457 = vsub.s32 1, %v1456
    %v1458 = vrot.slane %v1450, %v1457
    %v1459 = vlaneseq
    %v1460 = vshrl.u32 %v1459, 7
    %v1461 = vsub.s32 2, %v1460
    %v1462 = vrot.slane %v1450, %v1461
    %v1463 = vlaneseq
    %v1464 = vshrl.u32 %v1463, 7
    %v1465 = vsub.s32 3, %v1464
    %v1466 = vrot.slane %v1450, %v1465
    %vm1467 = vcmp.eq.s32.totalorder %v1454, 1
    %vm1468 = vcmp.eq.s32.totalorder %v1458, 1
    %vm1469 = vcmp.eq.s32.totalorder %v1462, 1
    %vm1470 = vcmp.eq.s32.totalorder %v1466, 1
    %v1471 = vsel %vm1467, %v1448, 0.0
    %v1472 = vsel %vm1468, %v1447, 0.0
    %v1473 = vsel %vm1469, %v1446, 0.0
    %v1474 = vsel %vm1470, %v1449, 0.0
    %1475 = vrot.lane.b32.xlu0 %v39, 100
    %v1476 = vpop.permute.xlu0 %1475
    %v1477 = vsel %vm117, %v1476, 0
    %v1480 = vsel %vm120, %v1471, 0
    %v1483 = vsel %vm120, %v1472, 0
    %v1486 = vsel %vm120, %v1473, 0
    %v1489 = vsel %vm120, %v1474, 0
    %1491 = vmatprep.subr.mxu0 %v1483
    %1492 = vmatpush1.msra.mxu0 %v1480
    %1493 = vmatprep.subr.mxu0 0.0
    %1494 = vmatpush1.msra.mxu0 0.0
    %1495 = vmatprep.subr.mxu0 0.0
    %1496 = vmatpush1.msra.mxu0 0.0
    %1497 = vmatprep.subr.mxu0 0.0
    %1498 = vmatpush1.msra.mxu0 0.0
    %1499 = vmatprep.subr.mxu0 0.0
    %1500 = vmatpush1.msra.mxu0 0.0
    %1501 = vmatprep.subr.mxu0 0.0
    %1502 = vmatpush1.msra.mxu0 0.0
    %1503 = vmatprep.subr.mxu0 0.0
    %1504 = vmatpush1.msra.mxu0 0.0
    %1505 = vmatprep.subr.mxu0 0.0
    %1506 = vmatpush1.msra.mxu0 0.0
    %1507 = vmatprep.subr.mxu0 0.0
    %1508 = vmatpush1.msra.mxu0 0.0
    %1509 = vmatprep.subr.mxu0 0.0
    %1510 = vmatpush1.msra.mxu0 0.0
    %1511 = vmatprep.subr.mxu0 0.0
    %1512 = vmatpush1.msra.mxu0 0.0
    %1513 = vmatprep.subr.mxu0 0.0
    %1514 = vmatpush1.msra.mxu0 0.0
    %1515 = vmatprep.subr.mxu0 0.0
    %1516 = vmatpush1.msra.mxu0 0.0
    %1517 = vmatprep.subr.mxu0 0.0
    %1518 = vmatpush1.msra.mxu0 0.0
    %1519 = vmatprep.subr.mxu0 0.0
    %1520 = vmatpush1.msra.mxu0 0.0
    %1521 = vmatprep.subr.mxu0 0.0
    %1522 = vmatpush1.msra.mxu0 0.0
    %1523 = vmatprep.subr.mxu0 0.0
    %1524 = vmatpush1.msra.mxu0 0.0
    %1525 = vmatprep.subr.mxu0 0.0
    %1526 = vmatpush1.msra.mxu0 0.0
    %1527 = vmatprep.subr.mxu0 0.0
    %1528 = vmatpush1.msra.mxu0 0.0
    %1529 = vmatprep.subr.mxu0 0.0
    %1530 = vmatpush1.msra.mxu0 0.0
    %1531 = vmatprep.subr.mxu0 0.0
    %1532 = vmatpush1.msra.mxu0 0.0
    %1533 = vmatprep.subr.mxu0 0.0
    %1534 = vmatpush1.msra.mxu0 0.0
    %1535 = vmatprep.subr.mxu0 0.0
    %1536 = vmatpush1.msra.mxu0 0.0
    %1537 = vmatprep.subr.mxu0 0.0
    %1538 = vmatpush1.msra.mxu0 0.0
    %1539 = vmatprep.subr.mxu0 0.0
    %1540 = vmatpush1.msra.mxu0 0.0
    %1541 = vmatprep.subr.mxu0 0.0
    %1542 = vmatpush1.msra.mxu0 0.0
    %1543 = vmatprep.subr.mxu0 0.0
    %1544 = vmatpush1.msra.mxu0 0.0
    %1545 = vmatprep.subr.mxu0 0.0
    %1546 = vmatpush1.msra.mxu0 0.0
    %1547 = vmatprep.subr.mxu0 0.0
    %1548 = vmatpush1.msra.mxu0 0.0
    %1549 = vmatprep.subr.mxu0 0.0
    %1550 = vmatpush1.msra.mxu0 0.0
    %1551 = vmatprep.subr.mxu0 0.0
    %1552 = vmatpush1.msra.mxu0 0.0
    %1553 = vmatprep.subr.mxu0 0.0
    %1554 = vmatpush1.msra.mxu0 0.0
    %1555 = vmatprep.mubr.f32.mxu0 0.0
    %1556 = vmatmul.mubr.f32.gmra.mrb[0].mxu0 %v1477
    %v1557 = vpop.f32.mrb[0].mxu0
    %v1558 = vadd.f32 0.0, %v1557
    %v1559 = vpop.f32.mrb[0].mxu0
    %v1560 = vadd.f32 0.0, %v1559
    %1561 = vdwg.mxu0
    %1562 = vmatprep.subr.mxu0 %v1489
    %1563 = vmatpush1.msra.mxu0 %v1486
    %1564 = vmatprep.subr.mxu0 0.0
    %1565 = vmatpush1.msra.mxu0 0.0
    %1566 = vmatprep.subr.mxu0 0.0
    %1567 = vmatpush1.msra.mxu0 0.0
    %1568 = vmatprep.subr.mxu0 0.0
    %1569 = vmatpush1.msra.mxu0 0.0
    %1570 = vmatprep.subr.mxu0 0.0
    %1571 = vmatpush1.msra.mxu0 0.0
    %1572 = vmatprep.subr.mxu0 0.0
    %1573 = vmatpush1.msra.mxu0 0.0
    %1574 = vmatprep.subr.mxu0 0.0
    %1575 = vmatpush1.msra.mxu0 0.0
    %1576 = vmatprep.subr.mxu0 0.0
    %1577 = vmatpush1.msra.mxu0 0.0
    %1578 = vmatprep.subr.mxu0 0.0
    %1579 = vmatpush1.msra.mxu0 0.0
    %1580 = vmatprep.subr.mxu0 0.0
    %1581 = vmatpush1.msra.mxu0 0.0
    %1582 = vmatprep.subr.mxu0 0.0
    %1583 = vmatpush1.msra.mxu0 0.0
    %1584 = vmatprep.subr.mxu0 0.0
    %1585 = vmatpush1.msra.mxu0 0.0
    %1586 = vmatprep.subr.mxu0 0.0
    %1587 = vmatpush1.msra.mxu0 0.0
    %1588 = vmatprep.subr.mxu0 0.0
    %1589 = vmatpush1.msra.mxu0 0.0
    %1590 = vmatprep.subr.mxu0 0.0
    %1591 = vmatpush1.msra.mxu0 0.0
    %1592 = vmatprep.subr.mxu0 0.0
    %1593 = vmatpush1.msra.mxu0 0.0
    %1594 = vmatprep.subr.mxu0 0.0
    %1595 = vmatpush1.msra.mxu0 0.0
    %1596 = vmatprep.subr.mxu0 0.0
    %1597 = vmatpush1.msra.mxu0 0.0
    %1598 = vmatprep.subr.mxu0 0.0
    %1599 = vmatpush1.msra.mxu0 0.0
    %1600 = vmatprep.subr.mxu0 0.0
    %1601 = vmatpush1.msra.mxu0 0.0
    %1602 = vmatprep.subr.mxu0 0.0
    %1603 = vmatpush1.msra.mxu0 0.0
    %1604 = vmatprep.subr.mxu0 0.0
    %1605 = vmatpush1.msra.mxu0 0.0
    %1606 = vmatprep.subr.mxu0 0.0
    %1607 = vmatpush1.msra.mxu0 0.0
    %1608 = vmatprep.subr.mxu0 0.0
    %1609 = vmatpush1.msra.mxu0 0.0
    %1610 = vmatprep.subr.mxu0 0.0
    %1611 = vmatpush1.msra.mxu0 0.0
    %1612 = vmatprep.subr.mxu0 0.0
    %1613 = vmatpush1.msra.mxu0 0.0
    %1614 = vmatprep.subr.mxu0 0.0
    %1615 = vmatpush1.msra.mxu0 0.0
    %1616 = vmatprep.subr.mxu0 0.0
    %1617 = vmatpush1.msra.mxu0 0.0
    %1618 = vmatprep.subr.mxu0 0.0
    %1619 = vmatpush1.msra.mxu0 0.0
    %1620 = vmatprep.subr.mxu0 0.0
    %1621 = vmatpush1.msra.mxu0 0.0
    %1622 = vmatprep.subr.mxu0 0.0
    %1623 = vmatpush1.msra.mxu0 0.0
    %1624 = vmatprep.subr.mxu0 0.0
    %1625 = vmatpush1.msra.mxu0 0.0
    %1626 = vmatprep.mubr.f32.mxu0 0.0
    %1627 = vmatmul.mubr.f32.gmra.mrb[0].mxu0 %v1477
    %v1628 = vpop.f32.mrb[0].mxu0
    %v1629 = vadd.f32 0.0, %v1628
    %v1630 = vpop.f32.mrb[0].mxu0
    %v1631 = vadd.f32 0.0, %v1630
    %1632 = vdwg.mxu0
    %v1633 = vadd.f32 %v1433, %v1558
    %v1634 = vadd.f32 %v1434, %v1560
    %v1635 = vadd.f32 %v1435, %v1629
    %v1636 = vadd.f32 %v1436, %v1631
    %1637 = vrot.lane.b32.xlu0 %v69, 111
    %v1638 = vpop.permute.xlu0 %1637
    %1639 = vrot.lane.b32.xlu0 %v73, 111
    %v1640 = vpop.permute.xlu0 %1639
    %1641 = vrot.lane.b32.xlu0 %v70, 111
    %v1642 = vpop.permute.xlu0 %1641
    %1643 = vrot.lane.b32.xlu0 %v74, 111
    %v1644 = vpop.permute.xlu0 %1643
    %vm1645 = vcmp.lt.s32.totalorder %v86, 111
    %v1646 = vsel %vm1645, %v1642, %v1644
    %v1647 = vsel %vm1645, %v1640, %v1642
    %v1648 = vsel %vm1645, %v1638, %v1640
    %v1649 = vsel %vm1645, %v1644, %v1638
    %v1650 = vsel %vm68, 1, 0
    %v1651 = vlaneseq
    %v1652 = vshrl.u32 %v1651, 7
    %v1653 = vsub.s32 0, %v1652
    %v1654 = vrot.slane %v1650, %v1653
    %v1655 = vlaneseq
    %v1656 = vshrl.u32 %v1655, 7
    %v1657 = vsub.s32 1, %v1656
    %v1658 = vrot.slane %v1650, %v1657
    %v1659 = vlaneseq
    %v1660 = vshrl.u32 %v1659, 7
    %v1661 = vsub.s32 2, %v1660
    %v1662 = vrot.slane %v1650, %v1661
    %v1663 = vlaneseq
    %v1664 = vshrl.u32 %v1663, 7
    %v1665 = vsub.s32 3, %v1664
    %v1666 = vrot.slane %v1650, %v1665
    %vm1667 = vcmp.eq.s32.totalorder %v1654, 1
    %vm1668 = vcmp.eq.s32.totalorder %v1658, 1
    %vm1669 = vcmp.eq.s32.totalorder %v1662, 1
    %vm1670 = vcmp.eq.s32.totalorder %v1666, 1
    %v1671 = vsel %vm1667, %v1648, 0.0
    %v1672 = vsel %vm1668, %v1647, 0.0
    %v1673 = vsel %vm1669, %v1646, 0.0
    %v1674 = vsel %vm1670, %v1649, 0.0
    %1675 = vrot.lane.b32.xlu0 %v39, 96
    %v1676 = vpop.permute.xlu0 %1675
    %v1677 = vsel %vm117, %v1676, 0
    %v1680 = vsel %vm120, %v1671, 0
    %v1683 = vsel %vm120, %v1672, 0
    %v1686 = vsel %vm120, %v1673, 0
    %v1689 = vsel %vm120, %v1674, 0
    %1691 = vmatprep.subr.mxu0 %v1683
    %1692 = vmatpush1.msra.mxu0 %v1680
    %1693 = vmatprep.subr.mxu0 0.0
    %1694 = vmatpush1.msra.mxu0 0.0
    %1695 = vmatprep.subr.mxu0 0.0
    %1696 = vmatpush1.msra.mxu0 0.0
    %1697 = vmatprep.subr.mxu0 0.0
    %1698 = vmatpush1.msra.mxu0 0.0
    %1699 = vmatprep.subr.mxu0 0.0
    %1700 = vmatpush1.msra.mxu0 0.0
    %1701 = vmatprep.subr.mxu0 0.0
    %1702 = vmatpush1.msra.mxu0 0.0
    %1703 = vmatprep.subr.mxu0 0.0
    %1704 = vmatpush1.msra.mxu0 0.0
    %1705 = vmatprep.subr.mxu0 0.0
    %1706 = vmatpush1.msra.mxu0 0.0
    %1707 = vmatprep.subr.mxu0 0.0
    %1708 = vmatpush1.msra.mxu0 0.0
    %1709 = vmatprep.subr.mxu0 0.0
    %1710 = vmatpush1.msra.mxu0 0.0
    %1711 = vmatprep.subr.mxu0 0.0
    %1712 = vmatpush1.msra.mxu0 0.0
    %1713 = vmatprep.subr.mxu0 0.0
    %1714 = vmatpush1.msra.mxu0 0.0
    %1715 = vmatprep.subr.mxu0 0.0
    %1716 = vmatpush1.msra.mxu0 0.0
    %1717 = vmatprep.subr.mxu0 0.0
    %1718 = vmatpush1.msra.mxu0 0.0
    %1719 = vmatprep.subr.mxu0 0.0
    %1720 = vmatpush1.msra.mxu0 0.0
    %1721 = vmatprep.subr.mxu0 0.0
    %1722 = vmatpush1.msra.mxu0 0.0
    %1723 = vmatprep.subr.mxu0 0.0
    %1724 = vmatpush1.msra.mxu0 0.0
    %1725 = vmatprep.subr.mxu0 0.0
    %1726 = vmatpush1.msra.mxu0 0.0
    %1727 = vmatprep.subr.mxu0 0.0
    %1728 = vmatpush1.msra.mxu0 0.0
    %1729 = vmatprep.subr.mxu0 0.0
    %1730 = vmatpush1.msra.mxu0 0.0
    %1731 = vmatprep.subr.mxu0 0.0
    %1732 = vmatpush1.msra.mxu0 0.0
    %1733 = vmatprep.subr.mxu0 0.0
    %1734 = vmatpush1.msra.mxu0 0.0
    %1735 = vmatprep.subr.mxu0 0.0
    %1736 = vmatpush1.msra.mxu0 0.0
    %1737 = vmatprep.subr.mxu0 0.0
    %1738 = vmatpush1.msra.mxu0 0.0
    %1739 = vmatprep.subr.mxu0 0.0
    %1740 = vmatpush1.msra.mxu0 0.0
    %1741 = vmatprep.subr.mxu0 0.0
    %1742 = vmatpush1.msra.mxu0 0.0
    %1743 = vmatprep.subr.mxu0 0.0
    %1744 = vmatpush1.msra.mxu0 0.0
    %1745 = vmatprep.subr.mxu0 0.0
    %1746 = vmatpush1.msra.mxu0 0.0
    %1747 = vmatprep.subr.mxu0 0.0
    %1748 = vmatpush1.msra.mxu0 0.0
    %1749 = vmatprep.subr.mxu0 0.0
    %1750 = vmatpush1.msra.mxu0 0.0
    %1751 = vmatprep.subr.mxu0 0.0
    %1752 = vmatpush1.msra.mxu0 0.0
    %1753 = vmatprep.subr.mxu0 0.0
    %1754 = vmatpush1.msra.mxu0 0.0
    %1755 = vmatprep.mubr.f32.mxu0 0.0
    %1756 = vmatmul.mubr.f32.gmra.mrb[0].mxu0 %v1677
    %v1757 = vpop.f32.mrb[0].mxu0
    %v1758 = vadd.f32 0.0, %v1757
    %v1759 = vpop.f32.mrb[0].mxu0
    %v1760 = vadd.f32 0.0, %v1759
    %1761 = vdwg.mxu0
    %1762 = vmatprep.subr.mxu0 %v1689
    %1763 = vmatpush1.msra.mxu0 %v1686
    %1764 = vmatprep.subr.mxu0 0.0
    %1765 = vmatpush1.msra.mxu0 0.0
    %1766 = vmatprep.subr.mxu0 0.0
    %1767 = vmatpush1.msra.mxu0 0.0
    %1768 = vmatprep.subr.mxu0 0.0
    %1769 = vmatpush1.msra.mxu0 0.0
    %1770 = vmatprep.subr.mxu0 0.0
    %1771 = vmatpush1.msra.mxu0 0.0
    %1772 = vmatprep.subr.mxu0 0.0
    %1773 = vmatpush1.msra.mxu0 0.0
    %1774 = vmatprep.subr.mxu0 0.0
    %1775 = vmatpush1.msra.mxu0 0.0
    %1776 = vmatprep.subr.mxu0 0.0
    %1777 = vmatpush1.msra.mxu0 0.0
    %1778 = vmatprep.subr.mxu0 0.0
    %1779 = vmatpush1.msra.mxu0 0.0
    %1780 = vmatprep.subr.mxu0 0.0
    %1781 = vmatpush1.msra.mxu0 0.0
    %1782 = vmatprep.subr.mxu0 0.0
    %1783 = vmatpush1.msra.mxu0 0.0
    %1784 = vmatprep.subr.mxu0 0.0
    %1785 = vmatpush1.msra.mxu0 0.0
    %1786 = vmatprep.subr.mxu0 0.0
    %1787 = vmatpush1.msra.mxu0 0.0
    %1788 = vmatprep.subr.mxu0 0.0
    %1789 = vmatpush1.msra.mxu0 0.0
    %1790 = vmatprep.subr.mxu0 0.0
    %1791 = vmatpush1.msra.mxu0 0.0
    %1792 = vmatprep.subr.mxu0 0.0
    %1793 = vmatpush1.msra.mxu0 0.0
    %1794 = vmatprep.subr.mxu0 0.0
    %1795 = vmatpush1.msra.mxu0 0.0
    %1796 = vmatprep.subr.mxu0 0.0
    %1797 = vmatpush1.msra.mxu0 0.0
    %1798 = vmatprep.subr.mxu0 0.0
    %1799 = vmatpush1.msra.mxu0 0.0
    %1800 = vmatprep.subr.mxu0 0.0
    %1801 = vmatpush1.msra.mxu0 0.0
    %1802 = vmatprep.subr.mxu0 0.0
    %1803 = vmatpush1.msra.mxu0 0.0
    %1804 = vmatprep.subr.mxu0 0.0
    %1805 = vmatpush1.msra.mxu0 0.0
    %1806 = vmatprep.subr.mxu0 0.0
    %1807 = vmatpush1.msra.mxu0 0.0
    %1808 = vmatprep.subr.mxu0 0.0
    %1809 = vmatpush1.msra.mxu0 0.0
    %1810 = vmatprep.subr.mxu0 0.0
    %1811 = vmatpush1.msra.mxu0 0.0
    %1812 = vmatprep.subr.mxu0 0.0
    %1813 = vmatpush1.msra.mxu0 0.0
    %1814 = vmatprep.subr.mxu0 0.0
    %1815 = vmatpush1.msra.mxu0 0.0
    %1816 = vmatprep.subr.mxu0 0.0
    %1817 = vmatpush1.msra.mxu0 0.0
    %1818 = vmatprep.subr.mxu0 0.0
    %1819 = vmatpush1.msra.mxu0 0.0
    %1820 = vmatprep.subr.mxu0 0.0
    %1821 = vmatpush1.msra.mxu0 0.0
    %1822 = vmatprep.subr.mxu0 0.0
    %1823 = vmatpush1.msra.mxu0 0.0
    %1824 = vmatprep.subr.mxu0 0.0
    %1825 = vmatpush1.msra.mxu0 0.0
    %1826 = vmatprep.mubr.f32.mxu0 0.0
    %1827 = vmatmul.mubr.f32.gmra.mrb[0].mxu0 %v1677
    %v1828 = vpop.f32.mrb[0].mxu0
    %v1829 = vadd.f32 0.0, %v1828
    %v1830 = vpop.f32.mrb[0].mxu0
    %v1831 = vadd.f32 0.0, %v1830
    %1832 = vdwg.mxu0
    %v1833 = vadd.f32 %v1633, %v1758
    %v1834 = vadd.f32 %v1634, %v1760
    %v1835 = vadd.f32 %v1635, %v1829
    %v1836 = vadd.f32 %v1636, %v1831
    %v1841 = vcombine.low %v1833, %v1834
    %v1842 = vcombine.low %v1835, %v1836
    %v1845 = vadd.f32 %v69, %v1841
    %v1846 = vadd.f32 %v70, %v1842
    %1847 = vst [vmem:[#allocation7] sm:$0xff] %v1845
    %1848 = vst [vmem:[#allocation7 + $0x8] sm:$0xff] %v1846
    // Predicated region
    $region22: #{tpu_custom_call.1} parent=1 // pred_check
      _
    $region23: #{tpu_custom_call.1} parent=1 // pred_check_branch
      %1850 = sbr.rel (0) target = $region25
    $region24: #{tpu_custom_call.1} parent=1 // pred_region
      %s1852 = ssub.s32 256, 256
      %1853 = vsyncadd [#allocation4], %s1852
      %s1855 = sshll.u32 [#allocation7], 4
      %s1856 = int_to_ptr.vmem [resolvable:$true] %s1855
      %1858 = dma.vmem_to_hbm [thread:$0]  %s1856, 256, %s3, [#allocation4]
    $region25: #{tpu_custom_call.1} parent=1 // pred_fallthru
      _
    // Predicated region
    $region26: #{tpu_custom_call.1} parent=1 // pred_check
      _
    $region27: #{tpu_custom_call.1} parent=1 // pred_check_branch
      %1860 = sbr.rel (0) target = $region29
    $region28: #{tpu_custom_call.1} parent=1 // pred_region
      %1861 = dma.done [#allocation4], 256
    $region29: #{tpu_custom_call.1} parent=1 // pred_fallthru
      _
    %1862 = vsyncpa [#allocation3], 1
    %1863 = vsyncpa [#allocation6], 1
    %1864 = vsyncpa [#allocation4], 1

</llo_original>
